<compile_context>
chip_gen: v5e
topology: v5e:2x2
jax: 0.10.0
libtpu: 0.0.40
codegen_flags: <defaults>
</compile_context>

<pallas_src>
import functools

import jax
import jax.numpy as jnp
from jax.experimental import pallas as pl
from jax.experimental.pallas import tpu as pltpu


# ----------------------------------------------------------------------------
# commons.squeeze / commons.unsqueeze  (layout glue, plain JAX)
# ----------------------------------------------------------------------------
def squeeze(x, x_mask, n_sqz):
    b, c, t = x.shape
    t = (t // n_sqz) * n_sqz
    x = x[:, :, :t]
    x_sqz = x.reshape(b, c, t // n_sqz, n_sqz)
    x_sqz = jnp.transpose(x_sqz, (0, 3, 1, 2)).reshape(b, c * n_sqz, t // n_sqz)
    x_mask = x_mask[:, :, n_sqz - 1::n_sqz]
    return x_sqz * x_mask, x_mask


def unsqueeze(x, x_mask, n_sqz):
    b, c, t = x.shape
    x_unsqz = x.reshape(b, n_sqz, c // n_sqz, t)
    x_unsqz = jnp.transpose(x_unsqz, (0, 2, 3, 1)).reshape(b, c // n_sqz, t * n_sqz)
    x_mask = jnp.repeat(x_mask[..., None], n_sqz, axis=-1).reshape(b, 1, t * n_sqz)
    return x_unsqz * x_mask, x_mask


# ----------------------------------------------------------------------------
# InvConvNear as a dense (C, C) matrix on the natural channel layout.
# z[c_out] = sum_{c_in} Wfull[c_out, c_in] * x[c_in]  reproduces
# view(b,2,cg,ns/2,t).permute(...)  ->  grouped 1x1 conv  ->  inverse permute.
# ----------------------------------------------------------------------------
def _build_invconv_full_weight(weight, C, n_split):
    ns = n_split
    ns2 = ns // 2
    cg = C // ns
    chan = jnp.arange(C)
    a = chan // (cg * ns2)
    rem = chan % (cg * ns2)
    grp = rem // ns2
    s = rem % ns2
    split = a * ns2 + s                       # split index of each natural channel
    wf = weight[split[:, None], split[None, :]]
    wf = wf * (grp[:, None] == grp[None, :]).astype(weight.dtype)
    return wf                                  # (C, C)


# ----------------------------------------------------------------------------
# Fused flow step kernel: ActNorm -> InvConvNear -> CouplingBlock(WN).
# One grid point = one batch element.
# ----------------------------------------------------------------------------
def _flow_step_kernel(x_ref, mask_ref,
                      an_logs_ref, an_bias_ref, ic_w_ref,
                      start_w_ref, start_b_ref,
                      in_w_ref, in_b_ref, rs_w_ref, rs_b_ref,
                      end_w_ref, end_b_ref,
                      z_ref, ld_ref,
                      hpad_ref,
                      *, n_layers, kernel_size, dilation_rate,
                      sigmoid_scale, hidden, c_half, p_max):
    H, K = hidden, kernel_size
    x = x_ref[0]                 # (C, T)
    mask = mask_ref[0]           # (1, T)
    T = x.shape[-1]

    # --- ActNorm: z = (bias + exp(logs) * x) * mask ---
    xa = (an_bias_ref[...] + jnp.exp(an_logs_ref[...]) * x) * mask       # (C, T)

    # --- InvConvNear: single (C, C) matmul (group structure folded into ic_w) ---
    xc = jnp.dot(ic_w_ref[...], xa, preferred_element_type=jnp.float32) * mask

    # --- CouplingBlock ---
    x0 = xc[:c_half]             # (C2, T) passthrough half
    x1 = xc[c_half:]             # (C2, T)

    # start 1x1 conv
    h = (jnp.dot(start_w_ref[...], x0, preferred_element_type=jnp.float32)
         + start_b_ref[...]) * mask                                      # (H, T)

    output = jnp.zeros((H, T), jnp.float32)
    hpad_ref[...] = jnp.zeros_like(hpad_ref)   # zero halos once (Conv1d zero pad)
    for i in range(n_layers):
        d = dilation_rate ** i
        p = d * (K - 1) // 2
        # write current h into the center of the padded scratch
        hpad_ref[:, p_max:p_max + T] = h
        # im2col: K shifted (zero-padded) views stacked along channels -> 1 matmul
        taps = [hpad_ref[:, p_max - p + k * d: p_max - p + k * d + T]
                for k in range(K)]
        slab = jnp.concatenate(taps, axis=0) if K > 1 else taps[0]       # (K*H, T)
        x_in = (jnp.dot(in_w_ref[i], slab, preferred_element_type=jnp.float32)
                + in_b_ref[i])                                           # (2H, T)
        # gated activation (g is None -> g_l = 0)
        acts = jnp.tanh(x_in[:H]) * jax.nn.sigmoid(x_in[H:])             # (H, T)
        rs_w_i = rs_w_ref[i]                                             # (2H, H)
        rs_b_i = rs_b_ref[i]                                             # (2H, 1)
        if i < n_layers - 1:
            rs = jnp.dot(rs_w_i, acts, preferred_element_type=jnp.float32) + rs_b_i
            h = (h + rs[:H]) * mask
            output = output + rs[H:]
        else:
            # last WN layer is skip-only: use only the skip half of the packed
            # (2H, H) weights -> no wasted zero-row matmul
            skip = (jnp.dot(rs_w_i[H:], acts, preferred_element_type=jnp.float32)
                    + rs_b_i[H:])
            output = output + skip
    wn_out = output * mask

    # end 1x1 conv -> (m, logs)
    out = (jnp.dot(end_w_ref[...], wn_out, preferred_element_type=jnp.float32)
           + end_b_ref[...])                                             # (2*C2, T)
    m = out[:c_half]
    logs = out[c_half:]
    if sigmoid_scale:
        logs = jnp.log(1e-6 + jax.nn.sigmoid(logs + 2.0))
    z1 = (m + jnp.exp(logs) * x1) * mask

    z_ref[0, :c_half, :] = x0.astype(z_ref.dtype)
    z_ref[0, c_half:, :] = z1.astype(z_ref.dtype)
    ld_ref[...] = jnp.reshape(jnp.sum(logs * mask), (1, 1, 1))


def flow_block_forward(x, x_mask, blk, hp):
    """One ActNorm + InvConvNear + CouplingBlock step, fused in one pallas_call."""
    B, C, T = x.shape
    C2 = C // 2
    H = hp["hidden_channels"]
    K = hp["kernel_size"]
    nl = hp["n_layers"]
    ns = hp["n_split"]
    p_max = (hp["dilation_rate"] ** (nl - 1)) * (K - 1) // 2

    cp = blk["coupling"]
    # kernel-layout parameter prep (tiny, done in XLA once per call)
    ic_w_full = _build_invconv_full_weight(blk["invconv_w"], C, ns)       # (C, C)
    in_w_flat = jnp.transpose(cp["in_w"], (0, 2, 1, 3)).reshape(nl, 2 * H, K * H)

    kern = functools.partial(
        _flow_step_kernel, n_layers=nl, kernel_size=K,
        dilation_rate=hp["dilation_rate"], sigmoid_scale=hp["sigmoid_scale"],
        hidden=H, c_half=C2, p_max=p_max)

    z, ld_cpl = pl.pallas_call(
        kern,
        out_shape=(jax.ShapeDtypeStruct((B, C, T), x.dtype),
                   jax.ShapeDtypeStruct((B, 1, 1), jnp.float32)),
        grid=(B,),
        in_specs=[
            pl.BlockSpec((1, C, T), lambda b: (b, 0, 0)),
            pl.BlockSpec((1, 1, T), lambda b: (b, 0, 0)),
            pl.BlockSpec((C, 1), lambda b: (0, 0)),
            pl.BlockSpec((C, 1), lambda b: (0, 0)),
            pl.BlockSpec((C, C), lambda b: (0, 0)),
            pl.BlockSpec((H, C2), lambda b: (0, 0)),
            pl.BlockSpec((H, 1), lambda b: (0, 0)),
            pl.BlockSpec((nl, 2 * H, K * H), lambda b: (0, 0, 0)),
            pl.BlockSpec((nl, 2 * H, 1), lambda b: (0, 0, 0)),
            pl.BlockSpec((nl, 2 * H, H), lambda b: (0, 0, 0)),
            pl.BlockSpec((nl, 2 * H, 1), lambda b: (0, 0, 0)),
            pl.BlockSpec((C, H), lambda b: (0, 0)),
            pl.BlockSpec((C, 1), lambda b: (0, 0)),
        ],
        out_specs=(pl.BlockSpec((1, C, T), lambda b: (b, 0, 0)),
                   pl.BlockSpec((1, 1, 1), lambda b: (b, 0, 0))),
        scratch_shapes=[pltpu.VMEM((H, T + 2 * p_max), jnp.float32)],
        compiler_params=pltpu.CompilerParams(dimension_semantics=("parallel",)),
    )(x, x_mask,
      blk["actnorm_logs"].reshape(C, 1), blk["actnorm_bias"].reshape(C, 1),
      ic_w_full,
      cp["start_w"], cp["start_b"],
      in_w_flat, cp["in_b"], cp["rs_w"], cp["rs_b"],
      cp["end_w"], cp["end_b"])

    # per-batch logdet: actnorm + invconv parts are cheap per-block scalars
    x_len = jnp.sum(x_mask, axis=(1, 2))
    ld_const = jnp.sum(blk["actnorm_logs"]) + blk["invconv_logdet"] * (C / ns)
    logdet = ld_const * x_len + ld_cpl[:, 0, 0]
    return z, logdet


# ----------------------------------------------------------------------------
# FlowSpecDecoder forward (reverse=False)
# ----------------------------------------------------------------------------
def flow_spec_decoder_forward(x, x_mask, params, hp):
    n_sqz = hp["n_sqz"]
    logdet_tot = jnp.zeros((x.shape[0],), jnp.float32)
    if n_sqz > 1:
        x, x_mask = squeeze(x, x_mask, n_sqz)
    for blk in params["blocks"]:
        x, ld = flow_block_forward(x, x_mask, blk, hp)
        logdet_tot = logdet_tot + ld
    if n_sqz > 1:
        x, x_mask = unsqueeze(x, x_mask, n_sqz)
    return x, logdet_tot


# ----------------------------------------------------------------------------
# Deterministic synthetic parameter init (shapes follow the torch __init__).
# NOTE: torch zero-inits ActNorm params and the coupling `end` conv; we use
# small nonzero deterministic values so every code path is exercised.
# Packing convention: last WN layer's skip-only weights live in rs_w[nl-1, H:, :].
# ----------------------------------------------------------------------------
def init_params(key, hp):
    C = hp["in_channels"] * hp["n_sqz"]
    H = hp["hidden_channels"]
    K = hp["kernel_size"]
    nl = hp["n_layers"]
    ns = hp["n_split"]
    c2 = C // 2
    blocks = []
    for _ in range(hp["n_blocks"]):
        key, *ks = jax.random.split(key, 12)
        actnorm_logs = 0.1 * jax.random.normal(ks[0], (C,), jnp.float32)
        actnorm_bias = 0.1 * jax.random.normal(ks[1], (C,), jnp.float32)

        w0 = jax.random.normal(ks[2], (ns, ns), jnp.float32)
        q, _ = jnp.linalg.qr(w0)
        q = jnp.where(jnp.linalg.det(q) < 0, q.at[:, 0].set(-q[:, 0]), q)
        logdet_w = jnp.linalg.slogdet(q)[1]          # det(q) > 0 by construction

        start_w = jax.random.normal(ks[3], (H, c2), jnp.float32) / (c2 ** 0.5)
        start_b = 0.1 * jax.random.normal(ks[4], (H, 1), jnp.float32)
        in_w = jax.random.normal(ks[5], (nl, K, 2 * H, H), jnp.float32) / ((H * K) ** 0.5)
        in_b = 0.1 * jax.random.normal(ks[6], (nl, 2 * H, 1), jnp.float32)
        rs_w = jax.random.normal(ks[7], (nl, 2 * H, H), jnp.float32) / (H ** 0.5)
        rs_b = 0.1 * jax.random.normal(ks[8], (nl, 2 * H, 1), jnp.float32)
        # last WN layer has only H (skip) output channels: its weights live in the
        # [H:] rows; the [:H] rows are unused by the kernel (kept zero for clarity)
        rs_w = rs_w.at[nl - 1, :H, :].set(0.0)
        rs_b = rs_b.at[nl - 1, :H, :].set(0.0)
        end_w = 0.1 * jax.random.normal(ks[9], (C, H), jnp.float32) / (H ** 0.5)
        end_b = 0.1 * jax.random.normal(ks[10], (C, 1), jnp.float32)

        blocks.append(dict(
            actnorm_logs=actnorm_logs, actnorm_bias=actnorm_bias,
            invconv_w=q, invconv_logdet=logdet_w,
            coupling=dict(start_w=start_w, start_b=start_b,
                          in_w=in_w, in_b=in_b, rs_w=rs_w, rs_b=rs_b,
                          end_w=end_w, end_b=end_b)))
    return dict(blocks=blocks)


if __name__ == "__main__":
    hp = dict(in_channels=4, hidden_channels=32, kernel_size=3, dilation_rate=1,
              n_blocks=2, n_layers=3, p_dropout=0.0, n_split=4, n_sqz=2,
              sigmoid_scale=False, gin_channels=0)
    B, T = 2, 16
    key = jax.random.PRNGKey(0)
    kx, kp = jax.random.split(key)
    x = jax.random.normal(kx, (B, hp["in_channels"], T), jnp.float32)
    lengths = jnp.array([16, 12], jnp.int32)
    t_idx = jnp.arange(T)[None, None, :]
    x_mask = (t_idx < lengths[:, None, None]).astype(jnp.float32)

    params = init_params(kp, hp)
    fwd = jax.jit(functools.partial(flow_spec_decoder_forward, hp=hp))
    z, logdet_tot = fwd(x, x_mask, params)
    jax.block_until_ready((z, logdet_tot))
    assert z.shape == (B, hp["in_channels"], T)
    assert logdet_tot.shape == (B,)
    print("KERNEL_OK")
</pallas_src>

<mosaic_0001>
module attributes {stable_mosaic.version = 11 : i64} {
  func.func @_flow_step_kernel(%arg0: i32, %arg1: memref<1x8x8xf32, #tpu.memory_space<vmem>>, %arg2: memref<1x1x8xf32, #tpu.memory_space<vmem>>, %arg3: memref<8x1xf32, #tpu.memory_space<vmem>>, %arg4: memref<8x1xf32, #tpu.memory_space<vmem>>, %arg5: memref<8x8xf32, #tpu.memory_space<vmem>>, %arg6: memref<32x4xf32, #tpu.memory_space<vmem>>, %arg7: memref<32x1xf32, #tpu.memory_space<vmem>>, %arg8: memref<3x64x96xf32, #tpu.memory_space<vmem>>, %arg9: memref<3x64x1xf32, #tpu.memory_space<vmem>>, %arg10: memref<3x64x32xf32, #tpu.memory_space<vmem>>, %arg11: memref<3x64x1xf32, #tpu.memory_space<vmem>>, %arg12: memref<8x32xf32, #tpu.memory_space<vmem>>, %arg13: memref<8x1xf32, #tpu.memory_space<vmem>>, %arg14: memref<1x8x8xf32, #tpu.memory_space<vmem>>, %arg15: memref<1x1x1xf32, #tpu.memory_space<vmem>>, %arg16: memref<32x10xf32, #tpu.memory_space<vmem>>) attributes {dimension_semantics = [#tpu.dimension_semantics<parallel>], iteration_bounds = array<i64: 2>, scalar_prefetch = 0 : i64, scratch_operands = 1 : i64, tpu.core_type = #tpu.core_type<tc>, window_params = [{transform_indices = @transform_0, window_bounds = array<i64: 1, 8, 8>}, {transform_indices = @transform_1, window_bounds = array<i64: 1, 1, 8>}, {pipeline_mode = #tpu.pipeline_mode<synchronous>, transform_indices = @transform_2, window_bounds = array<i64: 8, 1>}, {pipeline_mode = #tpu.pipeline_mode<synchronous>, transform_indices = @transform_3, window_bounds = array<i64: 8, 1>}, {pipeline_mode = #tpu.pipeline_mode<synchronous>, transform_indices = @transform_4, window_bounds = array<i64: 8, 8>}, {pipeline_mode = #tpu.pipeline_mode<synchronous>, transform_indices = @transform_5, window_bounds = array<i64: 32, 4>}, {pipeline_mode = #tpu.pipeline_mode<synchronous>, transform_indices = @transform_6, window_bounds = array<i64: 32, 1>}, {pipeline_mode = #tpu.pipeline_mode<synchronous>, transform_indices = @transform_7, window_bounds = array<i64: 3, 64, 96>}, {pipeline_mode = #tpu.pipeline_mode<synchronous>, transform_indices = @transform_8, window_bounds = array<i64: 3, 64, 1>}, {pipeline_mode = #tpu.pipeline_mode<synchronous>, transform_indices = @transform_9, window_bounds = array<i64: 3, 64, 32>}, {pipeline_mode = #tpu.pipeline_mode<synchronous>, transform_indices = @transform_10, window_bounds = array<i64: 3, 64, 1>}, {pipeline_mode = #tpu.pipeline_mode<synchronous>, transform_indices = @transform_11, window_bounds = array<i64: 8, 32>}, {pipeline_mode = #tpu.pipeline_mode<synchronous>, transform_indices = @transform_12, window_bounds = array<i64: 8, 1>}, {transform_indices = @transform_13, window_bounds = array<i64: 1, 8, 8>}, {transform_indices = @transform_14, window_bounds = array<i64: 1, 1, 1>}]} {
    %c0 = arith.constant 0 : index
    %c0_0 = arith.constant 0 : index
    %c0_1 = arith.constant 0 : index
    %0 = vector.load %arg1[%c0, %c0_0, %c0_1] : memref<1x8x8xf32, #tpu.memory_space<vmem>>, vector<1x8x8xf32>
    %1 = vector.shape_cast %0 : vector<1x8x8xf32> to vector<8x8xf32>
    %c0_2 = arith.constant 0 : index
    %c0_3 = arith.constant 0 : index
    %c0_4 = arith.constant 0 : index
    %2 = vector.load %arg2[%c0_2, %c0_3, %c0_4] : memref<1x1x8xf32, #tpu.memory_space<vmem>>, vector<1x1x8xf32>
    %3 = vector.shape_cast %2 : vector<1x1x8xf32> to vector<1x8xf32>
    %c0_5 = arith.constant 0 : index
    %c0_6 = arith.constant 0 : index
    %4 = vector.load %arg4[%c0_5, %c0_6] : memref<8x1xf32, #tpu.memory_space<vmem>>, vector<8x1xf32>
    %c0_7 = arith.constant 0 : index
    %c0_8 = arith.constant 0 : index
    %5 = vector.load %arg3[%c0_7, %c0_8] : memref<8x1xf32, #tpu.memory_space<vmem>>, vector<8x1xf32>
    %6 = math.exp %5 : vector<8x1xf32>
    %7 = vector.broadcast %6 : vector<8x1xf32> to vector<8x8xf32>
    %8 = arith.mulf %7, %1 : vector<8x8xf32>
    %9 = vector.broadcast %4 : vector<8x1xf32> to vector<8x8xf32>
    %10 = arith.addf %9, %8 : vector<8x8xf32>
    %11 = vector.broadcast %3 : vector<1x8xf32> to vector<8x8xf32>
    %12 = arith.mulf %10, %11 : vector<8x8xf32>
    %c0_9 = arith.constant 0 : index
    %c0_10 = arith.constant 0 : index
    %13 = vector.load %arg5[%c0_9, %c0_10] : memref<8x8xf32, #tpu.memory_space<vmem>>, vector<8x8xf32>
    %cst = arith.constant dense<0.000000e+00> : vector<8x8xf32>
    %14 = tpu.matmul %13, %12, %cst {dimension_numbers = #tpu.dot_dimension_numbers<[1], [0], [0], [1], [0, 0, 1, 1], [], []>} : vector<8x8xf32>, vector<8x8xf32>, vector<8x8xf32> -> vector<8x8xf32>
    %15 = vector.broadcast %3 : vector<1x8xf32> to vector<8x8xf32>
    %16 = arith.mulf %14, %15 : vector<8x8xf32>
    %17 = vector.extract_strided_slice %16 {offsets = [0, 0], sizes = [4, 8], strides = [1, 1]} : vector<8x8xf32> to vector<4x8xf32>
    %18 = vector.extract_strided_slice %16 {offsets = [4, 0], sizes = [4, 8], strides = [1, 1]} : vector<8x8xf32> to vector<4x8xf32>
    %c0_11 = arith.constant 0 : index
    %c0_12 = arith.constant 0 : index
    %19 = vector.load %arg6[%c0_11, %c0_12] : memref<32x4xf32, #tpu.memory_space<vmem>>, vector<32x4xf32>
    %cst_13 = arith.constant dense<0.000000e+00> : vector<32x8xf32>
    %20 = tpu.matmul %19, %17, %cst_13 {dimension_numbers = #tpu.dot_dimension_numbers<[1], [0], [0], [1], [0, 0, 1, 1], [], []>} : vector<32x4xf32>, vector<4x8xf32>, vector<32x8xf32> -> vector<32x8xf32>
    %c0_14 = arith.constant 0 : index
    %c0_15 = arith.constant 0 : index
    %21 = vector.load %arg7[%c0_14, %c0_15] : memref<32x1xf32, #tpu.memory_space<vmem>>, vector<32x1xf32>
    %22 = vector.broadcast %21 : vector<32x1xf32> to vector<32x8xf32>
    %23 = arith.addf %20, %22 : vector<32x8xf32>
    %24 = vector.broadcast %3 : vector<1x8xf32> to vector<32x8xf32>
    %25 = arith.mulf %23, %24 : vector<32x8xf32>
    %cst_16 = arith.constant 0.000000e+00 : f32
    %26 = vector.broadcast %cst_16 : f32 to vector<32x8xf32>
    %cst_17 = arith.constant 0.000000e+00 : f32
    %27 = vector.broadcast %cst_17 : f32 to vector<32x10xf32>
    %c0_18 = arith.constant 0 : index
    %c0_19 = arith.constant 0 : index
    %28 = vector.load %arg16[%c0_18, %c0_19] : memref<32x10xf32, #tpu.memory_space<vmem>>, vector<32x10xf32>
    tpu.vector_store %arg16[%c0_18, %c0_19], %27 {strides = array<i32>} : memref<32x10xf32, #tpu.memory_space<vmem>>, vector<32x10xf32>,
    %c0_20 = arith.constant 0 : index
    %c1 = arith.constant 1 : index
    %29 = vector.load %arg16[%c0_20, %c1] : memref<32x10xf32, #tpu.memory_space<vmem>>, vector<32x8xf32>
    tpu.vector_store %arg16[%c0_20, %c1], %25 {strides = array<i32>} : memref<32x10xf32, #tpu.memory_space<vmem>>, vector<32x8xf32>,
    %c0_21 = arith.constant 0 : index
    %c0_22 = arith.constant 0 : index
    %30 = vector.load %arg16[%c0_21, %c0_22] : memref<32x10xf32, #tpu.memory_space<vmem>>, vector<32x8xf32>
    %c0_23 = arith.constant 0 : index
    %c1_24 = arith.constant 1 : index
    %31 = vector.load %arg16[%c0_23, %c1_24] : memref<32x10xf32, #tpu.memory_space<vmem>>, vector<32x8xf32>
    %c0_25 = arith.constant 0 : index
    %c2 = arith.constant 2 : index
    %32 = vector.load %arg16[%c0_25, %c2] : memref<32x10xf32, #tpu.memory_space<vmem>>, vector<32x8xf32>
    %33 = tpu.concatenate %30, %31, %32 in 0 : vector<32x8xf32>, vector<32x8xf32>, vector<32x8xf32> -> vector<96x8xf32>
    %c0_26 = arith.constant 0 : index
    %c0_27 = arith.constant 0 : index
    %c0_28 = arith.constant 0 : index
    %34 = vector.load %arg8[%c0_26, %c0_27, %c0_28] : memref<3x64x96xf32, #tpu.memory_space<vmem>>, vector<1x64x96xf32>
    %35 = vector.shape_cast %34 : vector<1x64x96xf32> to vector<64x96xf32>
    %cst_29 = arith.constant dense<0.000000e+00> : vector<64x8xf32>
    %36 = tpu.matmul %35, %33, %cst_29 {dimension_numbers = #tpu.dot_dimension_numbers<[1], [0], [0], [1], [0, 0, 1, 1], [], []>} : vector<64x96xf32>, vector<96x8xf32>, vector<64x8xf32> -> vector<64x8xf32>
    %c0_30 = arith.constant 0 : index
    %c0_31 = arith.constant 0 : index
    %c0_32 = arith.constant 0 : index
    %37 = vector.load %arg9[%c0_30, %c0_31, %c0_32] : memref<3x64x1xf32, #tpu.memory_space<vmem>>, vector<1x64x1xf32>
    %38 = vector.shape_cast %37 : vector<1x64x1xf32> to vector<64x1xf32>
    %39 = vector.broadcast %38 : vector<64x1xf32> to vector<64x8xf32>
    %40 = arith.addf %36, %39 : vector<64x8xf32>
    %41 = vector.extract_strided_slice %40 {offsets = [0, 0], sizes = [32, 8], strides = [1, 1]} : vector<64x8xf32> to vector<32x8xf32>
    %42 = math.tanh %41 : vector<32x8xf32>
    %43 = vector.extract_strided_slice %40 {offsets = [32, 0], sizes = [32, 8], strides = [1, 1]} : vector<64x8xf32> to vector<32x8xf32>
    %44 = arith.negf %43 : vector<32x8xf32>
    %45 = math.exp %44 : vector<32x8xf32>
    %cst_33 = arith.constant 1.000000e+00 : f32
    %46 = vector.broadcast %cst_33 : f32 to vector<32x8xf32>
    %47 = arith.addf %46, %45 : vector<32x8xf32>
    %48 = arith.divf %46, %47 : vector<32x8xf32>
    %49 = arith.mulf %42, %48 : vector<32x8xf32>
    %c0_34 = arith.constant 0 : index
    %c0_35 = arith.constant 0 : index
    %c0_36 = arith.constant 0 : index
    %50 = vector.load %arg10[%c0_34, %c0_35, %c0_36] : memref<3x64x32xf32, #tpu.memory_space<vmem>>, vector<1x64x32xf32>
    %51 = vector.shape_cast %50 : vector<1x64x32xf32> to vector<64x32xf32>
    %c0_37 = arith.constant 0 : index
    %c0_38 = arith.constant 0 : index
    %c0_39 = arith.constant 0 : index
    %52 = vector.load %arg11[%c0_37, %c0_38, %c0_39] : memref<3x64x1xf32, #tpu.memory_space<vmem>>, vector<1x64x1xf32>
    %53 = vector.shape_cast %52 : vector<1x64x1xf32> to vector<64x1xf32>
    %cst_40 = arith.constant dense<0.000000e+00> : vector<64x8xf32>
    %54 = tpu.matmul %51, %49, %cst_40 {dimension_numbers = #tpu.dot_dimension_numbers<[1], [0], [0], [1], [0, 0, 1, 1], [], []>} : vector<64x32xf32>, vector<32x8xf32>, vector<64x8xf32> -> vector<64x8xf32>
    %55 = vector.broadcast %53 : vector<64x1xf32> to vector<64x8xf32>
    %56 = arith.addf %54, %55 : vector<64x8xf32>
    %57 = vector.extract_strided_slice %56 {offsets = [0, 0], sizes = [32, 8], strides = [1, 1]} : vector<64x8xf32> to vector<32x8xf32>
    %58 = arith.addf %25, %57 : vector<32x8xf32>
    %59 = vector.broadcast %3 : vector<1x8xf32> to vector<32x8xf32>
    %60 = arith.mulf %58, %59 : vector<32x8xf32>
    %61 = vector.extract_strided_slice %56 {offsets = [32, 0], sizes = [32, 8], strides = [1, 1]} : vector<64x8xf32> to vector<32x8xf32>
    %62 = arith.addf %26, %61 : vector<32x8xf32>
    %c0_41 = arith.constant 0 : index
    %c1_42 = arith.constant 1 : index
    %63 = vector.load %arg16[%c0_41, %c1_42] : memref<32x10xf32, #tpu.memory_space<vmem>>, vector<32x8xf32>
    tpu.vector_store %arg16[%c0_41, %c1_42], %60 {strides = array<i32>} : memref<32x10xf32, #tpu.memory_space<vmem>>, vector<32x8xf32>,
    %c0_43 = arith.constant 0 : index
    %c0_44 = arith.constant 0 : index
    %64 = vector.load %arg16[%c0_43, %c0_44] : memref<32x10xf32, #tpu.memory_space<vmem>>, vector<32x8xf32>
    %c0_45 = arith.constant 0 : index
    %c1_46 = arith.constant 1 : index
    %65 = vector.load %arg16[%c0_45, %c1_46] : memref<32x10xf32, #tpu.memory_space<vmem>>, vector<32x8xf32>
    %c0_47 = arith.constant 0 : index
    %c2_48 = arith.constant 2 : index
    %66 = vector.load %arg16[%c0_47, %c2_48] : memref<32x10xf32, #tpu.memory_space<vmem>>, vector<32x8xf32>
    %67 = tpu.concatenate %64, %65, %66 in 0 : vector<32x8xf32>, vector<32x8xf32>, vector<32x8xf32> -> vector<96x8xf32>
    %c1_49 = arith.constant 1 : index
    %c0_50 = arith.constant 0 : index
    %c0_51 = arith.constant 0 : index
    %68 = vector.load %arg8[%c1_49, %c0_50, %c0_51] : memref<3x64x96xf32, #tpu.memory_space<vmem>>, vector<1x64x96xf32>
    %69 = vector.shape_cast %68 : vector<1x64x96xf32> to vector<64x96xf32>
    %cst_52 = arith.constant dense<0.000000e+00> : vector<64x8xf32>
    %70 = tpu.matmul %69, %67, %cst_52 {dimension_numbers = #tpu.dot_dimension_numbers<[1], [0], [0], [1], [0, 0, 1, 1], [], []>} : vector<64x96xf32>, vector<96x8xf32>, vector<64x8xf32> -> vector<64x8xf32>
    %c1_53 = arith.constant 1 : index
    %c0_54 = arith.constant 0 : index
    %c0_55 = arith.constant 0 : index
    %71 = vector.load %arg9[%c1_53, %c0_54, %c0_55] : memref<3x64x1xf32, #tpu.memory_space<vmem>>, vector<1x64x1xf32>
    %72 = vector.shape_cast %71 : vector<1x64x1xf32> to vector<64x1xf32>
    %73 = vector.broadcast %72 : vector<64x1xf32> to vector<64x8xf32>
    %74 = arith.addf %70, %73 : vector<64x8xf32>
    %75 = vector.extract_strided_slice %74 {offsets = [0, 0], sizes = [32, 8], strides = [1, 1]} : vector<64x8xf32> to vector<32x8xf32>
    %76 = math.tanh %75 : vector<32x8xf32>
    %77 = vector.extract_strided_slice %74 {offsets = [32, 0], sizes = [32, 8], strides = [1, 1]} : vector<64x8xf32> to vector<32x8xf32>
    %78 = arith.negf %77 : vector<32x8xf32>
    %79 = math.exp %78 : vector<32x8xf32>
    %cst_56 = arith.constant 1.000000e+00 : f32
    %80 = vector.broadcast %cst_56 : f32 to vector<32x8xf32>
    %81 = arith.addf %80, %79 : vector<32x8xf32>
    %82 = arith.divf %80, %81 : vector<32x8xf32>
    %83 = arith.mulf %76, %82 : vector<32x8xf32>
    %c1_57 = arith.constant 1 : index
    %c0_58 = arith.constant 0 : index
    %c0_59 = arith.constant 0 : index
    %84 = vector.load %arg10[%c1_57, %c0_58, %c0_59] : memref<3x64x32xf32, #tpu.memory_space<vmem>>, vector<1x64x32xf32>
    %85 = vector.shape_cast %84 : vector<1x64x32xf32> to vector<64x32xf32>
    %c1_60 = arith.constant 1 : index
    %c0_61 = arith.constant 0 : index
    %c0_62 = arith.constant 0 : index
    %86 = vector.load %arg11[%c1_60, %c0_61, %c0_62] : memref<3x64x1xf32, #tpu.memory_space<vmem>>, vector<1x64x1xf32>
    %87 = vector.shape_cast %86 : vector<1x64x1xf32> to vector<64x1xf32>
    %cst_63 = arith.constant dense<0.000000e+00> : vector<64x8xf32>
    %88 = tpu.matmul %85, %83, %cst_63 {dimension_numbers = #tpu.dot_dimension_numbers<[1], [0], [0], [1], [0, 0, 1, 1], [], []>} : vector<64x32xf32>, vector<32x8xf32>, vector<64x8xf32> -> vector<64x8xf32>
    %89 = vector.broadcast %87 : vector<64x1xf32> to vector<64x8xf32>
    %90 = arith.addf %88, %89 : vector<64x8xf32>
    %91 = vector.extract_strided_slice %90 {offsets = [0, 0], sizes = [32, 8], strides = [1, 1]} : vector<64x8xf32> to vector<32x8xf32>
    %92 = arith.addf %60, %91 : vector<32x8xf32>
    %93 = vector.broadcast %3 : vector<1x8xf32> to vector<32x8xf32>
    %94 = arith.mulf %92, %93 : vector<32x8xf32>
    %95 = vector.extract_strided_slice %90 {offsets = [32, 0], sizes = [32, 8], strides = [1, 1]} : vector<64x8xf32> to vector<32x8xf32>
    %96 = arith.addf %62, %95 : vector<32x8xf32>
    %c0_64 = arith.constant 0 : index
    %c1_65 = arith.constant 1 : index
    %97 = vector.load %arg16[%c0_64, %c1_65] : memref<32x10xf32, #tpu.memory_space<vmem>>, vector<32x8xf32>
    tpu.vector_store %arg16[%c0_64, %c1_65], %94 {strides = array<i32>} : memref<32x10xf32, #tpu.memory_space<vmem>>, vector<32x8xf32>,
    %c0_66 = arith.constant 0 : index
    %c0_67 = arith.constant 0 : index
    %98 = vector.load %arg16[%c0_66, %c0_67] : memref<32x10xf32, #tpu.memory_space<vmem>>, vector<32x8xf32>
    %c0_68 = arith.constant 0 : index
    %c1_69 = arith.constant 1 : index
    %99 = vector.load %arg16[%c0_68, %c1_69] : memref<32x10xf32, #tpu.memory_space<vmem>>, vector<32x8xf32>
    %c0_70 = arith.constant 0 : index
    %c2_71 = arith.constant 2 : index
    %100 = vector.load %arg16[%c0_70, %c2_71] : memref<32x10xf32, #tpu.memory_space<vmem>>, vector<32x8xf32>
    %101 = tpu.concatenate %98, %99, %100 in 0 : vector<32x8xf32>, vector<32x8xf32>, vector<32x8xf32> -> vector<96x8xf32>
    %c2_72 = arith.constant 2 : index
    %c0_73 = arith.constant 0 : index
    %c0_74 = arith.constant 0 : index
    %102 = vector.load %arg8[%c2_72, %c0_73, %c0_74] : memref<3x64x96xf32, #tpu.memory_space<vmem>>, vector<1x64x96xf32>
    %103 = vector.shape_cast %102 : vector<1x64x96xf32> to vector<64x96xf32>
    %cst_75 = arith.constant dense<0.000000e+00> : vector<64x8xf32>
    %104 = tpu.matmul %103, %101, %cst_75 {dimension_numbers = #tpu.dot_dimension_numbers<[1], [0], [0], [1], [0, 0, 1, 1], [], []>} : vector<64x96xf32>, vector<96x8xf32>, vector<64x8xf32> -> vector<64x8xf32>
    %c2_76 = arith.constant 2 : index
    %c0_77 = arith.constant 0 : index
    %c0_78 = arith.constant 0 : index
    %105 = vector.load %arg9[%c2_76, %c0_77, %c0_78] : memref<3x64x1xf32, #tpu.memory_space<vmem>>, vector<1x64x1xf32>
    %106 = vector.shape_cast %105 : vector<1x64x1xf32> to vector<64x1xf32>
    %107 = vector.broadcast %106 : vector<64x1xf32> to vector<64x8xf32>
    %108 = arith.addf %104, %107 : vector<64x8xf32>
    %109 = vector.extract_strided_slice %108 {offsets = [0, 0], sizes = [32, 8], strides = [1, 1]} : vector<64x8xf32> to vector<32x8xf32>
    %110 = math.tanh %109 : vector<32x8xf32>
    %111 = vector.extract_strided_slice %108 {offsets = [32, 0], sizes = [32, 8], strides = [1, 1]} : vector<64x8xf32> to vector<32x8xf32>
    %112 = arith.negf %111 : vector<32x8xf32>
    %113 = math.exp %112 : vector<32x8xf32>
    %cst_79 = arith.constant 1.000000e+00 : f32
    %114 = vector.broadcast %cst_79 : f32 to vector<32x8xf32>
    %115 = arith.addf %114, %113 : vector<32x8xf32>
    %116 = arith.divf %114, %115 : vector<32x8xf32>
    %117 = arith.mulf %110, %116 : vector<32x8xf32>
    %c2_80 = arith.constant 2 : index
    %c0_81 = arith.constant 0 : index
    %c0_82 = arith.constant 0 : index
    %118 = vector.load %arg10[%c2_80, %c0_81, %c0_82] : memref<3x64x32xf32, #tpu.memory_space<vmem>>, vector<1x64x32xf32>
    %119 = vector.shape_cast %118 : vector<1x64x32xf32> to vector<64x32xf32>
    %c2_83 = arith.constant 2 : index
    %c0_84 = arith.constant 0 : index
    %c0_85 = arith.constant 0 : index
    %120 = vector.load %arg11[%c2_83, %c0_84, %c0_85] : memref<3x64x1xf32, #tpu.memory_space<vmem>>, vector<1x64x1xf32>
    %121 = vector.shape_cast %120 : vector<1x64x1xf32> to vector<64x1xf32>
    %122 = vector.extract_strided_slice %119 {offsets = [32, 0], sizes = [32, 32], strides = [1, 1]} : vector<64x32xf32> to vector<32x32xf32>
    %cst_86 = arith.constant dense<0.000000e+00> : vector<32x8xf32>
    %123 = tpu.matmul %122, %117, %cst_86 {dimension_numbers = #tpu.dot_dimension_numbers<[1], [0], [0], [1], [0, 0, 1, 1], [], []>} : vector<32x32xf32>, vector<32x8xf32>, vector<32x8xf32> -> vector<32x8xf32>
    %124 = vector.extract_strided_slice %121 {offsets = [32, 0], sizes = [32, 1], strides = [1, 1]} : vector<64x1xf32> to vector<32x1xf32>
    %125 = vector.broadcast %124 : vector<32x1xf32> to vector<32x8xf32>
    %126 = arith.addf %123, %125 : vector<32x8xf32>
    %127 = arith.addf %96, %126 : vector<32x8xf32>
    %128 = vector.broadcast %3 : vector<1x8xf32> to vector<32x8xf32>
    %129 = arith.mulf %127, %128 : vector<32x8xf32>
    %c0_87 = arith.constant 0 : index
    %c0_88 = arith.constant 0 : index
    %130 = vector.load %arg12[%c0_87, %c0_88] : memref<8x32xf32, #tpu.memory_space<vmem>>, vector<8x32xf32>
    %cst_89 = arith.constant dense<0.000000e+00> : vector<8x8xf32>
    %131 = tpu.matmul %130, %129, %cst_89 {dimension_numbers = #tpu.dot_dimension_numbers<[1], [0], [0], [1], [0, 0, 1, 1], [], []>} : vector<8x32xf32>, vector<32x8xf32>, vector<8x8xf32> -> vector<8x8xf32>
    %c0_90 = arith.constant 0 : index
    %c0_91 = arith.constant 0 : index
    %132 = vector.load %arg13[%c0_90, %c0_91] : memref<8x1xf32, #tpu.memory_space<vmem>>, vector<8x1xf32>
    %133 = vector.broadcast %132 : vector<8x1xf32> to vector<8x8xf32>
    %134 = arith.addf %131, %133 : vector<8x8xf32>
    %135 = vector.extract_strided_slice %134 {offsets = [0, 0], sizes = [4, 8], strides = [1, 1]} : vector<8x8xf32> to vector<4x8xf32>
    %136 = vector.extract_strided_slice %134 {offsets = [4, 0], sizes = [4, 8], strides = [1, 1]} : vector<8x8xf32> to vector<4x8xf32>
    %137 = math.exp %136 : vector<4x8xf32>
    %138 = arith.mulf %137, %18 : vector<4x8xf32>
    %139 = arith.addf %135, %138 : vector<4x8xf32>
    %140 = vector.broadcast %3 : vector<1x8xf32> to vector<4x8xf32>
    %141 = arith.mulf %139, %140 : vector<4x8xf32>
    %c0_92 = arith.constant 0 : index
    %c0_93 = arith.constant 0 : index
    %c0_94 = arith.constant 0 : index
    %142 = vector.load %arg14[%c0_92, %c0_93, %c0_94] : memref<1x8x8xf32, #tpu.memory_space<vmem>>, vector<1x4x8xf32>
    %143 = vector.shape_cast %142 : vector<1x4x8xf32> to vector<4x8xf32>
    %144 = vector.shape_cast %17 : vector<4x8xf32> to vector<1x4x8xf32>
    tpu.vector_store %arg14[%c0_92, %c0_93, %c0_94], %144 {strides = array<i32>} : memref<1x8x8xf32, #tpu.memory_space<vmem>>, vector<1x4x8xf32>,
    %c0_95 = arith.constant 0 : index
    %c4 = arith.constant 4 : index
    %c0_96 = arith.constant 0 : index
    %145 = vector.load %arg14[%c0_95, %c4, %c0_96] : memref<1x8x8xf32, #tpu.memory_space<vmem>>, vector<1x4x8xf32>
    %146 = vector.shape_cast %145 : vector<1x4x8xf32> to vector<4x8xf32>
    %147 = vector.shape_cast %141 : vector<4x8xf32> to vector<1x4x8xf32>
    tpu.vector_store %arg14[%c0_95, %c4, %c0_96], %147 {strides = array<i32>} : memref<1x8x8xf32, #tpu.memory_space<vmem>>, vector<1x4x8xf32>,
    %148 = vector.broadcast %3 : vector<1x8xf32> to vector<4x8xf32>
    %149 = arith.mulf %136, %148 : vector<4x8xf32>
    %150 = vector.shape_cast %149 : vector<4x8xf32> to vector<1x4x8xf32>
    %cst_97 = arith.constant dense<0.000000e+00> : vector<1xf32>
    %151 = vector.multi_reduction <add>, %150, %cst_97 [1, 2] : vector<1x4x8xf32> to vector<1xf32>
    %152 = vector.shape_cast %151 : vector<1xf32> to vector<1x1x1xf32>
    %153 = vector.extract %152[0, 0, 0] : f32 from vector<1x1x1xf32>
    %154 = vector.broadcast %153 : f32 to vector<1x1x1xf32>
    %c0_98 = arith.constant 0 : index
    %c0_99 = arith.constant 0 : index
    %c0_100 = arith.constant 0 : index
    %155 = vector.load %arg15[%c0_98, %c0_99, %c0_100] : memref<1x1x1xf32, #tpu.memory_space<vmem>>, vector<1x1x1xf32>
    tpu.vector_store %arg15[%c0_98, %c0_99, %c0_100], %154 {strides = array<i32>} : memref<1x1x1xf32, #tpu.memory_space<vmem>>, vector<1x1x1xf32>,
    return
  }
  func.func @transform_0(%arg0: i32) -> (i32, i32, i32) {
    %c0_i32 = arith.constant 0 : i32
    %c0_i32_0 = arith.constant 0 : i32
    %c0_i32_1 = arith.constant 0 : i32
    return %arg0, %c0_i32, %c0_i32_0 : i32, i32, i32
  }
  func.func @transform_1(%arg0: i32) -> (i32, i32, i32) {
    %c0_i32 = arith.constant 0 : i32
    %c0_i32_0 = arith.constant 0 : i32
    %c0_i32_1 = arith.constant 0 : i32
    return %arg0, %c0_i32, %c0_i32_0 : i32, i32, i32
  }
  func.func @transform_2(%arg0: i32) -> (i32, i32) {
    %c0_i32 = arith.constant 0 : i32
    %c0_i32_0 = arith.constant 0 : i32
    %c0_i32_1 = arith.constant 0 : i32
    return %c0_i32, %c0_i32_0 : i32, i32
  }
  func.func @transform_3(%arg0: i32) -> (i32, i32) {
    %c0_i32 = arith.constant 0 : i32
    %c0_i32_0 = arith.constant 0 : i32
    %c0_i32_1 = arith.constant 0 : i32
    return %c0_i32, %c0_i32_0 : i32, i32
  }
  func.func @transform_4(%arg0: i32) -> (i32, i32) {
    %c0_i32 = arith.constant 0 : i32
    %c0_i32_0 = arith.constant 0 : i32
    %c0_i32_1 = arith.constant 0 : i32
    return %c0_i32, %c0_i32_0 : i32, i32
  }
  func.func @transform_5(%arg0: i32) -> (i32, i32) {
    %c0_i32 = arith.constant 0 : i32
    %c0_i32_0 = arith.constant 0 : i32
    %c0_i32_1 = arith.constant 0 : i32
    return %c0_i32, %c0_i32_0 : i32, i32
  }
  func.func @transform_6(%arg0: i32) -> (i32, i32) {
    %c0_i32 = arith.constant 0 : i32
    %c0_i32_0 = arith.constant 0 : i32
    %c0_i32_1 = arith.constant 0 : i32
    return %c0_i32, %c0_i32_0 : i32, i32
  }
  func.func @transform_7(%arg0: i32) -> (i32, i32, i32) {
    %c0_i32 = arith.constant 0 : i32
    %c0_i32_0 = arith.constant 0 : i32
    %c0_i32_1 = arith.constant 0 : i32
    %c0_i32_2 = arith.constant 0 : i32
    return %c0_i32, %c0_i32_0, %c0_i32_1 : i32, i32, i32
  }
  func.func @transform_8(%arg0: i32) -> (i32, i32, i32) {
    %c0_i32 = arith.constant 0 : i32
    %c0_i32_0 = arith.constant 0 : i32
    %c0_i32_1 = arith.constant 0 : i32
    %c0_i32_2 = arith.constant 0 : i32
    return %c0_i32, %c0_i32_0, %c0_i32_1 : i32, i32, i32
  }
  func.func @transform_9(%arg0: i32) -> (i32, i32, i32) {
    %c0_i32 = arith.constant 0 : i32
    %c0_i32_0 = arith.constant 0 : i32
    %c0_i32_1 = arith.constant 0 : i32
    %c0_i32_2 = arith.constant 0 : i32
    return %c0_i32, %c0_i32_0, %c0_i32_1 : i32, i32, i32
  }
  func.func @transform_10(%arg0: i32) -> (i32, i32, i32) {
    %c0_i32 = arith.constant 0 : i32
    %c0_i32_0 = arith.constant 0 : i32
    %c0_i32_1 = arith.constant 0 : i32
    %c0_i32_2 = arith.constant 0 : i32
    return %c0_i32, %c0_i32_0, %c0_i32_1 : i32, i32, i32
  }
  func.func @transform_11(%arg0: i32) -> (i32, i32) {
    %c0_i32 = arith.constant 0 : i32
    %c0_i32_0 = arith.constant 0 : i32
    %c0_i32_1 = arith.constant 0 : i32
    return %c0_i32, %c0_i32_0 : i32, i32
  }
  func.func @transform_12(%arg0: i32) -> (i32, i32) {
    %c0_i32 = arith.constant 0 : i32
    %c0_i32_0 = arith.constant 0 : i32
    %c0_i32_1 = arith.constant 0 : i32
    return %c0_i32, %c0_i32_0 : i32, i32
  }
  func.func @transform_13(%arg0: i32) -> (i32, i32, i32) {
    %c0_i32 = arith.constant 0 : i32
    %c0_i32_0 = arith.constant 0 : i32
    %c0_i32_1 = arith.constant 0 : i32
    return %arg0, %c0_i32, %c0_i32_0 : i32, i32, i32
  }
  func.func @transform_14(%arg0: i32) -> (i32, i32, i32) {
    %c0_i32 = arith.constant 0 : i32
    %c0_i32_0 = arith.constant 0 : i32
    %c0_i32_1 = arith.constant 0 : i32
    return %arg0, %c0_i32, %c0_i32_0 : i32, i32, i32
  }
}

</mosaic_0001>

<llo_original>
// kernel: mul.33
$region0: #{mul.33}
  %s0 = inlined_call_operand.vmem [shape: f32[2,8,1,2], index: 0, kind: input, shape index: {}]
  %s1 = inlined_call_operand.vmem [shape: f32[2,16], index: 1, kind: output, shape index: {}]
  $region1: #{mul.33} parent=0
    #allocation0 [shape = 'u8[4096]{0}', space=vmem, size = 0x1000, scoped, tag = 'scoped mem for output reshape']
    %s2 = smov 3
    %v3 = vld [vmem:[%s0] ss:$8 sm:%s2]
    %vm4 = vcmask 15360
    %5 = vst.msk [vmem:[#allocation0] sm:$0x3] %vm4, %v3
    %s6 = scalar_lea.vmem %s0, 7
    %s7 = smov 3
    %v8 = vld [vmem:[%s6] ss:$8 sm:%s7]
    %9 = vrot.lane.b32.xlu0 %v8, 14
    %v10 = vpop.permute.xlu0 %9
    %vm11 = vcmask 130160
    %12 = vst.msk [vmem:[#allocation0] sm:$0x3] %vm11, %v10
    %s13 = scalar_lea.vmem %s0, 6
    %s14 = smov 3
    %v15 = vld [vmem:[%s13] ss:$8 sm:%s14]
    %16 = vrot.lane.b32.xlu0 %v15, 12
    %v17 = vpop.permute.xlu0 %16
    %vm18 = vcmask 113760
    %19 = vst.msk [vmem:[#allocation0] sm:$0x3] %vm18, %v17
    %s20 = scalar_lea.vmem %s0, 5
    %s21 = smov 3
    %v22 = vld [vmem:[%s20] ss:$8 sm:%s21]
    %23 = vrot.lane.b32.xlu0 %v22, 10
    %v24 = vpop.permute.xlu0 %23
    %vm25 = vcmask 97360
    %26 = vst.msk [vmem:[#allocation0] sm:$0x3] %vm25, %v24
    %s27 = scalar_lea.vmem %s0, 4
    %s28 = smov 3
    %v29 = vld [vmem:[%s27] ss:$8 sm:%s28]
    %30 = vrot.lane.b32.xlu0 %v29, 8
    %v31 = vpop.permute.xlu0 %30
    %vm32 = vcmask 80960
    %33 = vst.msk [vmem:[#allocation0] sm:$0x3] %vm32, %v31
    %s34 = scalar_lea.vmem %s0, 3
    %s35 = smov 3
    %v36 = vld [vmem:[%s34] ss:$8 sm:%s35]
    %37 = vrot.lane.b32.xlu0 %v36, 6
    %v38 = vpop.permute.xlu0 %37
    %vm39 = vcmask 64560
    %40 = vst.msk [vmem:[#allocation0] sm:$0x3] %vm39, %v38
    %s41 = scalar_lea.vmem %s0, 2
    %s42 = smov 3
    %v43 = vld [vmem:[%s41] ss:$8 sm:%s42]
    %44 = vrot.lane.b32.xlu0 %v43, 4
    %v45 = vpop.permute.xlu0 %44
    %vm46 = vcmask 48160
    %47 = vst.msk [vmem:[#allocation0] sm:$0x3] %vm46, %v45
    %s48 = scalar_lea.vmem %s0, 1
    %s49 = smov 3
    %v50 = vld [vmem:[%s48] ss:$8 sm:%s49]
    %51 = vrot.lane.b32.xlu0 %v50, 2
    %v52 = vpop.permute.xlu0 %51
    %vm53 = vcmask 31760
    %54 = vst.msk [vmem:[#allocation0] sm:$0x3] %vm53, %v52
    %s56 = ssub.s32 4, 1
    %v57 = vld [vmem:[#allocation0] sm:%s56]
    %s59 = ssub.s32 4, 1
    %60 = vst [vmem:[%s1] sm:%s59] %v57

// kernel: flow_spec_decoder_forward.2
$region0: #{flow_spec_decoder_forward.2}
  #allocation0 [shape = 'u32[]', space=smem, size = 0x4, offset = 0x4, fixed_abs, tag = 'smem constant byte address 0x4 - core index']
  #allocation1 [shape = 'u32[72,128]{1,0:T(1,128)}', space=vmem, size = 0x9000, scoped, tag = 'internal scratch']
  #allocation2 [shape = 'f32[32,10]{1,0:T(8,128)}', space=vmem, size = 0x4000, scoped, tag = 'scratch operand']
  %s0 = inlined_call_operand.vmem [shape: f32[2,8,8], index: 0, kind: input, shape index: {}]
  %s1 = inlined_call_operand.vmem [shape: f32[2,1,8], index: 1, kind: input, shape index: {}]
  %s2 = inlined_call_operand.vmem [shape: f32[8,1], index: 2, kind: input, shape index: {}]
  %s3 = inlined_call_operand.vmem [shape: f32[8,1], index: 3, kind: input, shape index: {}]
  %s4 = inlined_call_operand.vmem [shape: f32[8,8], index: 4, kind: input, shape index: {}]
  %s5 = inlined_call_operand.vmem [shape: f32[32,4], index: 5, kind: input, shape index: {}]
  %s6 = inlined_call_operand.vmem [shape: f32[32,1], index: 6, kind: input, shape index: {}]
  %s7 = inlined_call_operand.vmem [shape: f32[3,64,96], index: 7, kind: input, shape index: {}]
  %s8 = inlined_call_operand.vmem [shape: f32[3,64,1], index: 8, kind: input, shape index: {}]
  %s9 = inlined_call_operand.vmem [shape: f32[3,64,32], index: 9, kind: input, shape index: {}]
  %s10 = inlined_call_operand.vmem [shape: f32[3,64,1], index: 10, kind: input, shape index: {}]
  %s11 = inlined_call_operand.vmem [shape: f32[8,32], index: 11, kind: input, shape index: {}]
  %s12 = inlined_call_operand.vmem [shape: f32[8,1], index: 12, kind: input, shape index: {}]
  %s13 = inlined_call_operand.vmem [shape: f32[2,8,8], index: 13, kind: output, shape index: {0}]
  %s14 = inlined_call_operand.vmem [shape: f32[2,1,1], index: 14, kind: output, shape index: {1}]
  %15 = xla_tuple %s13, %s14
  %s16 = sld [smem:[#allocation0]]
  $region93: #{flow_spec_decoder_forward.2} parent=0
    _
  %s18 = ssub.s32 1, %s16
  %s19 = scalar_select 0, %s18, %s16
  loop: start=0, step=1, limit=4
  $region2: #{flow_spec_decoder_forward.2} parent=0 // loop_pre_header
    _
  $region3: #{flow_spec_decoder_forward.2} parent=0 // loop_header
    %s21 = sphi 0, %s25
    %p22 = scmp.ge.s32.totalorder %s21, 4
    %s31 = sphi 0, %s33
    %s34 = sphi 0, %s31
    %s35 = sphi 0, %s34
    %s51 = sphi 0, %s35
    %s57 = sphi 0, %s59
    %s60 = sphi 0, %s57
    %s61 = sphi 0, %s60
    %s77 = sphi 0, %s61
    %s81 = sphi 0, %s81
    %s83 = sphi 0, %s81
    %s84 = sphi 0, %s83
    %s98 = sphi 0, %s84
    %s102 = sphi 0, %s102
    %s104 = sphi 0, %s102
    %s105 = sphi 0, %s104
    %s119 = sphi 0, %s105
    %s123 = sphi 0, %s123
    %s125 = sphi 0, %s123
    %s126 = sphi 0, %s125
    %s140 = sphi 0, %s126
    %s144 = sphi 0, %s144
    %s146 = sphi 0, %s144
    %s147 = sphi 0, %s146
    %s161 = sphi 0, %s147
    %s165 = sphi 0, %s165
    %s167 = sphi 0, %s165
    %s168 = sphi 0, %s167
    %s182 = sphi 0, %s168
    %s186 = sphi 0, %s186
    %s188 = sphi 0, %s186
    %s189 = sphi 0, %s188
    %s203 = sphi 0, %s189
    %s207 = sphi 0, %s207
    %s209 = sphi 0, %s207
    %s210 = sphi 0, %s209
    %s224 = sphi 0, %s210
    %s228 = sphi 0, %s228
    %s230 = sphi 0, %s228
    %s231 = sphi 0, %s230
    %s245 = sphi 0, %s231
    %s249 = sphi 0, %s249
    %s251 = sphi 0, %s249
    %s252 = sphi 0, %s251
    %s266 = sphi 0, %s252
    %s270 = sphi 0, %s270
    %s272 = sphi 0, %s270
    %s273 = sphi 0, %s272
    %s287 = sphi 0, %s273
    %s291 = sphi 0, %s291
    %s293 = sphi 0, %s291
    %s294 = sphi 0, %s293
    %s308 = sphi 0, %s294
    %s314 = sphi 0, %s316
    %s317 = sphi 0, %s314
    %s318 = sphi 0, %s317
    %s334 = sphi 0, %s318
    %s340 = sphi 0, %s342
    %s343 = sphi 0, %s340
    %s344 = sphi 0, %s343
    %s360 = sphi 0, %s344
  $region4: #{flow_spec_decoder_forward.2} parent=0 // loop_header_branch
    %24 = sbr.rel (%p22) target = $region8
  $region5: #{flow_spec_decoder_forward.2} parent=0 // loop_body
    %s26 = ssub.s32 %s21, 1
    %s27 = ssub.s32 %s21, 2
    %s28 = sadd.s32 %s21, 1
    %s29 = ssub.s32 %s21, %s28
    %p30 = scmp.eq.s32.totalorder %s29, 0
    %s32 = sadd.s32 %s31, 1
    %s33 = scalar_select %p30, %s31, %s32
    %p36 = pneg %p30
    %p37 = scmp.eq.s32.totalorder %s21, 1
    %p38 = por %p36, %p37
    %p39 = scmp.ne.s32.totalorder %s31, %s34
    %p40 = scmp.eq.s32.totalorder %s21, 0
    %p41 = por %p39, %p40
    %p42 = scmp.ne.s32.totalorder %s31, %s34
    %p43 = scmp.eq.s32.totalorder %s26, 1
    %p44 = por %p42, %p43
    %p45 = scmp.ne.s32.totalorder %s34, %s35
    %p46 = scmp.eq.s32.totalorder %s26, 0
    %p47 = por %p45, %p46
    %p48 = scmp.ne.s32.totalorder %s34, %s35
    %p49 = scmp.eq.s32.totalorder %s27, 1
    %p50 = por %p48, %p49
    %p52 = scmp.ne.s32.totalorder %s35, %s51
    %p53 = scmp.eq.s32.totalorder %s27, 0
    %p54 = por %p52, %p53
    %s55 = ssub.s32 %s21, %s28
    %p56 = scmp.eq.s32.totalorder %s55, 0
    %s58 = sadd.s32 %s57, 1
    %s59 = scalar_select %p56, %s57, %s58
    %p62 = pneg %p56
    %p63 = scmp.eq.s32.totalorder %s21, 1
    %p64 = por %p62, %p63
    %p65 = scmp.ne.s32.totalorder %s57, %s60
    %p66 = scmp.eq.s32.totalorder %s21, 0
    %p67 = por %p65, %p66
    %p68 = scmp.ne.s32.totalorder %s57, %s60
    %p69 = scmp.eq.s32.totalorder %s26, 1
    %p70 = por %p68, %p69
    %p71 = scmp.ne.s32.totalorder %s60, %s61
    %p72 = scmp.eq.s32.totalorder %s26, 0
    %p73 = por %p71, %p72
    %p74 = scmp.ne.s32.totalorder %s60, %s61
    %p75 = scmp.eq.s32.totalorder %s27, 1
    %p76 = por %p74, %p75
    %p78 = scmp.ne.s32.totalorder %s61, %s77
    %p79 = scmp.eq.s32.totalorder %s27, 0
    %p80 = por %p78, %p79
    %s82 = sadd.s32 %s81, 1
    %p85 = scmp.eq.s32.totalorder %s21, 1
    %p86 = scmp.ne.s32.totalorder %s81, %s83
    %p87 = scmp.eq.s32.totalorder %s21, 0
    %p88 = por %p86, %p87
    %p89 = scmp.ne.s32.totalorder %s81, %s83
    %p90 = scmp.eq.s32.totalorder %s26, 1
    %p91 = por %p89, %p90
    %p92 = scmp.ne.s32.totalorder %s83, %s84
    %p93 = scmp.eq.s32.totalorder %s26, 0
    %p94 = por %p92, %p93
    %p95 = scmp.ne.s32.totalorder %s83, %s84
    %p96 = scmp.eq.s32.totalorder %s27, 1
    %p97 = por %p95, %p96
    %p99 = scmp.ne.s32.totalorder %s84, %s98
    %p100 = scmp.eq.s32.totalorder %s27, 0
    %p101 = por %p99, %p100
    %s103 = sadd.s32 %s102, 1
    %p106 = scmp.eq.s32.totalorder %s21, 1
    %p107 = scmp.ne.s32.totalorder %s102, %s104
    %p108 = scmp.eq.s32.totalorder %s21, 0
    %p109 = por %p107, %p108
    %p110 = scmp.ne.s32.totalorder %s102, %s104
    %p111 = scmp.eq.s32.totalorder %s26, 1
    %p112 = por %p110, %p111
    %p113 = scmp.ne.s32.totalorder %s104, %s105
    %p114 = scmp.eq.s32.totalorder %s26, 0
    %p115 = por %p113, %p114
    %p116 = scmp.ne.s32.totalorder %s104, %s105
    %p117 = scmp.eq.s32.totalorder %s27, 1
    %p118 = por %p116, %p117
    %p120 = scmp.ne.s32.totalorder %s105, %s119
    %p121 = scmp.eq.s32.totalorder %s27, 0
    %p122 = por %p120, %p121
    %s124 = sadd.s32 %s123, 1
    %p127 = scmp.eq.s32.totalorder %s21, 1
    %p128 = scmp.ne.s32.totalorder %s123, %s125
    %p129 = scmp.eq.s32.totalorder %s21, 0
    %p130 = por %p128, %p129
    %p131 = scmp.ne.s32.totalorder %s123, %s125
    %p132 = scmp.eq.s32.totalorder %s26, 1
    %p133 = por %p131, %p132
    %p134 = scmp.ne.s32.totalorder %s125, %s126
    %p135 = scmp.eq.s32.totalorder %s26, 0
    %p136 = por %p134, %p135
    %p137 = scmp.ne.s32.totalorder %s125, %s126
    %p138 = scmp.eq.s32.totalorder %s27, 1
    %p139 = por %p137, %p138
    %p141 = scmp.ne.s32.totalorder %s126, %s140
    %p142 = scmp.eq.s32.totalorder %s27, 0
    %p143 = por %p141, %p142
    %s145 = sadd.s32 %s144, 1
    %p148 = scmp.eq.s32.totalorder %s21, 1
    %p149 = scmp.ne.s32.totalorder %s144, %s146
    %p150 = scmp.eq.s32.totalorder %s21, 0
    %p151 = por %p149, %p150
    %p152 = scmp.ne.s32.totalorder %s144, %s146
    %p153 = scmp.eq.s32.totalorder %s26, 1
    %p154 = por %p152, %p153
    %p155 = scmp.ne.s32.totalorder %s146, %s147
    %p156 = scmp.eq.s32.totalorder %s26, 0
    %p157 = por %p155, %p156
    %p158 = scmp.ne.s32.totalorder %s146, %s147
    %p159 = scmp.eq.s32.totalorder %s27, 1
    %p160 = por %p158, %p159
    %p162 = scmp.ne.s32.totalorder %s147, %s161
    %p163 = scmp.eq.s32.totalorder %s27, 0
    %p164 = por %p162, %p163
    %s166 = sadd.s32 %s165, 1
    %p169 = scmp.eq.s32.totalorder %s21, 1
    %p170 = scmp.ne.s32.totalorder %s165, %s167
    %p171 = scmp.eq.s32.totalorder %s21, 0
    %p172 = por %p170, %p171
    %p173 = scmp.ne.s32.totalorder %s165, %s167
    %p174 = scmp.eq.s32.totalorder %s26, 1
    %p175 = por %p173, %p174
    %p176 = scmp.ne.s32.totalorder %s167, %s168
    %p177 = scmp.eq.s32.totalorder %s26, 0
    %p178 = por %p176, %p177
    %p179 = scmp.ne.s32.totalorder %s167, %s168
    %p180 = scmp.eq.s32.totalorder %s27, 1
    %p181 = por %p179, %p180
    %p183 = scmp.ne.s32.totalorder %s168, %s182
    %p184 = scmp.eq.s32.totalorder %s27, 0
    %p185 = por %p183, %p184
    %s187 = sadd.s32 %s186, 1
    %p190 = scmp.eq.s32.totalorder %s21, 1
    %p191 = scmp.ne.s32.totalorder %s186, %s188
    %p192 = scmp.eq.s32.totalorder %s21, 0
    %p193 = por %p191, %p192
    %p194 = scmp.ne.s32.totalorder %s186, %s188
    %p195 = scmp.eq.s32.totalorder %s26, 1
    %p196 = por %p194, %p195
    %p197 = scmp.ne.s32.totalorder %s188, %s189
    %p198 = scmp.eq.s32.totalorder %s26, 0
    %p199 = por %p197, %p198
    %p200 = scmp.ne.s32.totalorder %s188, %s189
    %p201 = scmp.eq.s32.totalorder %s27, 1
    %p202 = por %p200, %p201
    %p204 = scmp.ne.s32.totalorder %s189, %s203
    %p205 = scmp.eq.s32.totalorder %s27, 0
    %p206 = por %p204, %p205
    %s208 = sadd.s32 %s207, 1
    %p211 = scmp.eq.s32.totalorder %s21, 1
    %p212 = scmp.ne.s32.totalorder %s207, %s209
    %p213 = scmp.eq.s32.totalorder %s21, 0
    %p214 = por %p212, %p213
    %p215 = scmp.ne.s32.totalorder %s207, %s209
    %p216 = scmp.eq.s32.totalorder %s26, 1
    %p217 = por %p215, %p216
    %p218 = scmp.ne.s32.totalorder %s209, %s210
    %p219 = scmp.eq.s32.totalorder %s26, 0
    %p220 = por %p218, %p219
    %p221 = scmp.ne.s32.totalorder %s209, %s210
    %p222 = scmp.eq.s32.totalorder %s27, 1
    %p223 = por %p221, %p222
    %p225 = scmp.ne.s32.totalorder %s210, %s224
    %p226 = scmp.eq.s32.totalorder %s27, 0
    %p227 = por %p225, %p226
    %s229 = sadd.s32 %s228, 1
    %p232 = scmp.eq.s32.totalorder %s21, 1
    %p233 = scmp.ne.s32.totalorder %s228, %s230
    %p234 = scmp.eq.s32.totalorder %s21, 0
    %p235 = por %p233, %p234
    %p236 = scmp.ne.s32.totalorder %s228, %s230
    %p237 = scmp.eq.s32.totalorder %s26, 1
    %p238 = por %p236, %p237
    %p239 = scmp.ne.s32.totalorder %s230, %s231
    %p240 = scmp.eq.s32.totalorder %s26, 0
    %p241 = por %p239, %p240
    %p242 = scmp.ne.s32.totalorder %s230, %s231
    %p243 = scmp.eq.s32.totalorder %s27, 1
    %p244 = por %p242, %p243
    %p246 = scmp.ne.s32.totalorder %s231, %s245
    %p247 = scmp.eq.s32.totalorder %s27, 0
    %p248 = por %p246, %p247
    %s250 = sadd.s32 %s249, 1
    %p253 = scmp.eq.s32.totalorder %s21, 1
    %p254 = scmp.ne.s32.totalorder %s249, %s251
    %p255 = scmp.eq.s32.totalorder %s21, 0
    %p256 = por %p254, %p255
    %p257 = scmp.ne.s32.totalorder %s249, %s251
    %p258 = scmp.eq.s32.totalorder %s26, 1
    %p259 = por %p257, %p258
    %p260 = scmp.ne.s32.totalorder %s251, %s252
    %p261 = scmp.eq.s32.totalorder %s26, 0
    %p262 = por %p260, %p261
    %p263 = scmp.ne.s32.totalorder %s251, %s252
    %p264 = scmp.eq.s32.totalorder %s27, 1
    %p265 = por %p263, %p264
    %p267 = scmp.ne.s32.totalorder %s252, %s266
    %p268 = scmp.eq.s32.totalorder %s27, 0
    %p269 = por %p267, %p268
    %s271 = sadd.s32 %s270, 1
    %p274 = scmp.eq.s32.totalorder %s21, 1
    %p275 = scmp.ne.s32.totalorder %s270, %s272
    %p276 = scmp.eq.s32.totalorder %s21, 0
    %p277 = por %p275, %p276
    %p278 = scmp.ne.s32.totalorder %s270, %s272
    %p279 = scmp.eq.s32.totalorder %s26, 1
    %p280 = por %p278, %p279
    %p281 = scmp.ne.s32.totalorder %s272, %s273
    %p282 = scmp.eq.s32.totalorder %s26, 0
    %p283 = por %p281, %p282
    %p284 = scmp.ne.s32.totalorder %s272, %s273
    %p285 = scmp.eq.s32.totalorder %s27, 1
    %p286 = por %p284, %p285
    %p288 = scmp.ne.s32.totalorder %s273, %s287
    %p289 = scmp.eq.s32.totalorder %s27, 0
    %p290 = por %p288, %p289
    %s292 = sadd.s32 %s291, 1
    %p295 = scmp.eq.s32.totalorder %s21, 1
    %p296 = scmp.ne.s32.totalorder %s291, %s293
    %p297 = scmp.eq.s32.totalorder %s21, 0
    %p298 = por %p296, %p297
    %p299 = scmp.ne.s32.totalorder %s291, %s293
    %p300 = scmp.eq.s32.totalorder %s26, 1
    %p301 = por %p299, %p300
    %p302 = scmp.ne.s32.totalorder %s293, %s294
    %p303 = scmp.eq.s32.totalorder %s26, 0
    %p304 = por %p302, %p303
    %p305 = scmp.ne.s32.totalorder %s293, %s294
    %p306 = scmp.eq.s32.totalorder %s27, 1
    %p307 = por %p305, %p306
    %p309 = scmp.ne.s32.totalorder %s294, %s308
    %p310 = scmp.eq.s32.totalorder %s27, 0
    %p311 = por %p309, %p310
    %s312 = ssub.s32 %s21, %s28
    %p313 = scmp.eq.s32.totalorder %s312, 0
    %s315 = sadd.s32 %s314, 1
    %s316 = scalar_select %p313, %s314, %s315
    %p319 = pneg %p313
    %p320 = scmp.eq.s32.totalorder %s21, 1
    %p321 = por %p319, %p320
    %p322 = scmp.ne.s32.totalorder %s314, %s317
    %p323 = scmp.eq.s32.totalorder %s21, 0
    %p324 = por %p322, %p323
    %p325 = scmp.ne.s32.totalorder %s314, %s317
    %p326 = scmp.eq.s32.totalorder %s26, 1
    %p327 = por %p325, %p326
    %p328 = scmp.ne.s32.totalorder %s317, %s318
    %p329 = scmp.eq.s32.totalorder %s26, 0
    %p330 = por %p328, %p329
    %p331 = scmp.ne.s32.totalorder %s317, %s318
    %p332 = scmp.eq.s32.totalorder %s27, 1
    %p333 = por %p331, %p332
    %p335 = scmp.ne.s32.totalorder %s318, %s334
    %p336 = scmp.eq.s32.totalorder %s27, 0
    %p337 = por %p335, %p336
    %s338 = ssub.s32 %s21, %s28
    %p339 = scmp.eq.s32.totalorder %s338, 0
    %s341 = sadd.s32 %s340, 1
    %s342 = scalar_select %p339, %s340, %s341
    %p345 = pneg %p339
    %p346 = scmp.eq.s32.totalorder %s21, 1
    %p347 = por %p345, %p346
    %p348 = scmp.ne.s32.totalorder %s340, %s343
    %p349 = scmp.eq.s32.totalorder %s21, 0
    %p350 = por %p348, %p349
    %p351 = scmp.ne.s32.totalorder %s340, %s343
    %p352 = scmp.eq.s32.totalorder %s26, 1
    %p353 = por %p351, %p352
    %p354 = scmp.ne.s32.totalorder %s343, %s344
    %p355 = scmp.eq.s32.totalorder %s26, 0
    %p356 = por %p354, %p355
    %p357 = scmp.ne.s32.totalorder %s343, %s344
    %p358 = scmp.eq.s32.totalorder %s27, 1
    %p359 = por %p357, %p358
    %p361 = scmp.ne.s32.totalorder %s344, %s360
    %p362 = scmp.eq.s32.totalorder %s27, 0
    %p363 = por %p361, %p362
    %p364 = scmp.le.s32.totalorder 1, %s21
    %p365 = scmp.lt.s32.totalorder %s21, 3
    %p366 = pnand %p364, %p365
    %p367 = pneg %p366
    // Predicated region
    $region9: #{flow_spec_decoder_forward.2} parent=5 // pred_check
      _
    $region10: #{flow_spec_decoder_forward.2} parent=5 // pred_check_branch
      %369 = sbr.rel (%p366) target = $region12
    $region11: #{flow_spec_decoder_forward.2} parent=5 // pred_region
      %s370 = ssub.s32 %s21, 1
      // Predicated region
      $region13: #{flow_spec_decoder_forward.2} parent=11 // pred_check
        %p371 = pneg %p94
      $region14: #{flow_spec_decoder_forward.2} parent=11 // pred_check_branch
        %373 = sbr.rel (%p371) target = $region16
      $region15: #{flow_spec_decoder_forward.2} parent=11 // pred_region
        _
      $region16: #{flow_spec_decoder_forward.2} parent=11 // pred_fallthru
        _
      // Predicated region
      $region17: #{flow_spec_decoder_forward.2} parent=11 // pred_check
        %p374 = pneg %p115
      $region18: #{flow_spec_decoder_forward.2} parent=11 // pred_check_branch
        %376 = sbr.rel (%p374) target = $region20
      $region19: #{flow_spec_decoder_forward.2} parent=11 // pred_region
        _
      $region20: #{flow_spec_decoder_forward.2} parent=11 // pred_fallthru
        _
      // Predicated region
      $region21: #{flow_spec_decoder_forward.2} parent=11 // pred_check
        %p377 = pneg %p136
      $region22: #{flow_spec_decoder_forward.2} parent=11 // pred_check_branch
        %379 = sbr.rel (%p377) target = $region24
      $region23: #{flow_spec_decoder_forward.2} parent=11 // pred_region
        _
      $region24: #{flow_spec_decoder_forward.2} parent=11 // pred_fallthru
        _
      // Predicated region
      $region25: #{flow_spec_decoder_forward.2} parent=11 // pred_check
        %p380 = pneg %p157
      $region26: #{flow_spec_decoder_forward.2} parent=11 // pred_check_branch
        %382 = sbr.rel (%p380) target = $region28
      $region27: #{flow_spec_decoder_forward.2} parent=11 // pred_region
        _
      $region28: #{flow_spec_decoder_forward.2} parent=11 // pred_fallthru
        _
      // Predicated region
      $region29: #{flow_spec_decoder_forward.2} parent=11 // pred_check
        %p383 = pneg %p178
      $region30: #{flow_spec_decoder_forward.2} parent=11 // pred_check_branch
        %385 = sbr.rel (%p383) target = $region32
      $region31: #{flow_spec_decoder_forward.2} parent=11 // pred_region
        _
      $region32: #{flow_spec_decoder_forward.2} parent=11 // pred_fallthru
        _
      // Predicated region
      $region33: #{flow_spec_decoder_forward.2} parent=11 // pred_check
        %p386 = pneg %p199
      $region34: #{flow_spec_decoder_forward.2} parent=11 // pred_check_branch
        %388 = sbr.rel (%p386) target = $region36
      $region35: #{flow_spec_decoder_forward.2} parent=11 // pred_region
        _
      $region36: #{flow_spec_decoder_forward.2} parent=11 // pred_fallthru
        _
      // Predicated region
      $region37: #{flow_spec_decoder_forward.2} parent=11 // pred_check
        %p389 = pneg %p220
      $region38: #{flow_spec_decoder_forward.2} parent=11 // pred_check_branch
        %391 = sbr.rel (%p389) target = $region40
      $region39: #{flow_spec_decoder_forward.2} parent=11 // pred_region
        _
      $region40: #{flow_spec_decoder_forward.2} parent=11 // pred_fallthru
        _
      // Predicated region
      $region41: #{flow_spec_decoder_forward.2} parent=11 // pred_check
        %p392 = pneg %p241
      $region42: #{flow_spec_decoder_forward.2} parent=11 // pred_check_branch
        %394 = sbr.rel (%p392) target = $region44
      $region43: #{flow_spec_decoder_forward.2} parent=11 // pred_region
        _
      $region44: #{flow_spec_decoder_forward.2} parent=11 // pred_fallthru
        _
      // Predicated region
      $region45: #{flow_spec_decoder_forward.2} parent=11 // pred_check
        %p395 = pneg %p262
      $region46: #{flow_spec_decoder_forward.2} parent=11 // pred_check_branch
        %397 = sbr.rel (%p395) target = $region48
      $region47: #{flow_spec_decoder_forward.2} parent=11 // pred_region
        _
      $region48: #{flow_spec_decoder_forward.2} parent=11 // pred_fallthru
        _
      // Predicated region
      $region49: #{flow_spec_decoder_forward.2} parent=11 // pred_check
        %p398 = pneg %p283
      $region50: #{flow_spec_decoder_forward.2} parent=11 // pred_check_branch
        %400 = sbr.rel (%p398) target = $region52
      $region51: #{flow_spec_decoder_forward.2} parent=11 // pred_region
        _
      $region52: #{flow_spec_decoder_forward.2} parent=11 // pred_fallthru
        _
      // Predicated region
      $region53: #{flow_spec_decoder_forward.2} parent=11 // pred_check
        %p401 = pneg %p304
      $region54: #{flow_spec_decoder_forward.2} parent=11 // pred_check_branch
        %403 = sbr.rel (%p401) target = $region56
      $region55: #{flow_spec_decoder_forward.2} parent=11 // pred_region
        _
      $region56: #{flow_spec_decoder_forward.2} parent=11 // pred_fallthru
        _
    $region12: #{flow_spec_decoder_forward.2} parent=5 // pred_fallthru
      _
    %p404 = scmp.lt.s32.totalorder %s21, 2
    // Predicated region
    $region57: #{flow_spec_decoder_forward.2} parent=5 // pred_check
      %p405 = pneg %p404
    $region58: #{flow_spec_decoder_forward.2} parent=5 // pred_check_branch
      %407 = sbr.rel (%p405) target = $region60
    $region59: #{flow_spec_decoder_forward.2} parent=5 // pred_region
      // Predicated region
      $region61: #{flow_spec_decoder_forward.2} parent=59 // pred_check
        %p408 = pneg %p41
      $region62: #{flow_spec_decoder_forward.2} parent=59 // pred_check_branch
        %410 = sbr.rel (%p408) target = $region64
      $region63: #{flow_spec_decoder_forward.2} parent=59 // pred_region
        %p411 = scmp.lt.s32.totalorder %s21, 1
        %s412 = scalar_select %p411, %s21, 1
        %s413 = smul.addr %s412, 8
        %s414 = scalar_lea.vmem %s0, %s413
      $region64: #{flow_spec_decoder_forward.2} parent=59 // pred_fallthru
        _
      // Predicated region
      $region65: #{flow_spec_decoder_forward.2} parent=59 // pred_check
        %p415 = pneg %p67
      $region66: #{flow_spec_decoder_forward.2} parent=59 // pred_check_branch
        %417 = sbr.rel (%p415) target = $region68
      $region67: #{flow_spec_decoder_forward.2} parent=59 // pred_region
        %p418 = scmp.lt.s32.totalorder %s21, 1
        %s419 = scalar_select %p418, %s21, 1
        %s420 = scalar_lea.vmem %s1, %s419
      $region68: #{flow_spec_decoder_forward.2} parent=59 // pred_fallthru
        _
    $region60: #{flow_spec_decoder_forward.2} parent=5 // pred_fallthru
      _
    %p421 = scmp.le.s32.totalorder 1, %s21
    %p422 = scmp.lt.s32.totalorder %s21, 3
    %p423 = pnand %p421, %p422
    %p424 = pneg %p423
    // Predicated region
    $region69: #{flow_spec_decoder_forward.2} parent=5 // pred_check
      _
    $region70: #{flow_spec_decoder_forward.2} parent=5 // pred_check_branch
      %426 = sbr.rel (%p423) target = $region72
    $region71: #{flow_spec_decoder_forward.2} parent=5 // pred_region
      %s427 = ssub.s32 %s21, 1
      %p428 = scmp.lt.s32.totalorder %s26, 1
      %s429 = scalar_select %p428, %s26, 1
      %s430 = smul.addr %s429, 8
      %s431 = scalar_lea.vmem %s0, %s430
      %p432 = pneg %p47
      %p433 = pneg %p44
      %p434 = scmp.lt.s32.totalorder %s26, 1
      %s435 = scalar_select %p434, %s26, 1
      %s436 = scalar_lea.vmem %s1, %s435
      %p437 = pneg %p73
      %p438 = pneg %p70
      %p439 = pneg %p94
      %p440 = pneg %p91
      %p441 = pneg %p115
      %p442 = pneg %p112
      %p443 = pneg %p136
      %p444 = pneg %p133
      %p445 = pneg %p157
      %p446 = pneg %p154
      %p447 = pneg %p178
      %p448 = pneg %p175
      %p449 = pneg %p199
      %p450 = pneg %p196
      %p451 = pneg %p220
      %p452 = pneg %p217
      %p453 = pneg %p241
      %p454 = pneg %p238
      %p455 = pneg %p262
      %p456 = pneg %p259
      %p457 = pneg %p283
      %p458 = pneg %p280
      %p459 = pneg %p304
      %p460 = pneg %p301
      %p461 = pneg %p330
      %p462 = pneg %p327
      %p463 = scmp.lt.s32.totalorder %s26, 1
      %s464 = scalar_select %p463, %s26, 1
      %s465 = smul.addr %s464, 8
      %s466 = scalar_lea.vmem %s13, %s465
      %p467 = pneg %p356
      %p468 = pneg %p353
      %p469 = scmp.lt.s32.totalorder %s26, 1
      %s470 = scalar_select %p469, %s26, 1
      %s471 = scalar_lea.vmem %s14, %s470
      %p472 = scmp.lt.s32.totalorder %s26, 1
      %s473 = scalar_select %p472, %s26, 1
      %s474 = smul.addr %s473, 8
      %s475 = scalar_lea.vmem %s0, %s474
      %p476 = scmp.lt.s32.totalorder %s26, 1
      %s477 = scalar_select %p476, %s26, 1
      %s478 = scalar_lea.vmem %s1, %s477
      %p479 = scmp.lt.s32.totalorder %s26, 1
      %s480 = scalar_select %p479, %s26, 1
      %s481 = smul.addr %s480, 8
      %s482 = scalar_lea.vmem %s13, %s481
      %p483 = scmp.lt.s32.totalorder %s26, 1
      %s484 = scalar_select %p483, %s26, 1
      %s485 = scalar_lea.vmem %s14, %s484
      %v486 = vld [vmem:[%s475] sm:$0xff]
      %v487 = vld [vmem:[%s478] sm:$0x1]
      %v488 = vld [vmem:[%s3] sm:$0xff]
      %v489 = vld [vmem:[%s2] sm:$0xff]
      %v490 = vmul.f32 %v489, 1.442695
      %v491 = vpow.pop %v490
      %493 = vset.pattern.permute.xlu0 0
      %494 = vperm.xlu0 %493, %v491
      %v495 = vpop.permute.xlu0 %494
      %v497 = vmul.f32 %v495, %v486
      %499 = vset.pattern.permute.xlu0 0
      %500 = vperm.xlu0 %499, %v488
      %v501 = vpop.permute.xlu0 %500
      %v503 = vadd.f32 %v501, %v497
      %v505 = vperm.slane %v487, 0
      %v507 = vmul.f32 %v503, %v505
      %v508 = vld [vmem:[%s4] sm:$0xff]
      %vm509 = vcmask 64512
      %v511 = vsel %vm509, %v508, 0
      %513 = vmatpush.msra.mxu0 0.0
      %514 = vmatpush.msra.mxu0 0.0
      %515 = vmatpush.msra.mxu0 0.0
      %516 = vmatpush.msra.mxu0 0.0
      %517 = vmatpush.msra.mxu0 0.0
      %518 = vmatpush.msra.mxu0 0.0
      %519 = vmatpush.msra.mxu0 0.0
      %520 = vmatpush.msra.mxu0 0.0
      %521 = vmatpush.msra.mxu0 0.0
      %522 = vmatpush.msra.mxu0 0.0
      %523 = vmatpush.msra.mxu0 0.0
      %524 = vmatpush.msra.mxu0 0.0
      %525 = vmatpush.msra.mxu0 0.0
      %526 = vmatpush.msra.mxu0 0.0
      %527 = vmatpush.msra.mxu0 0.0
      %528 = vmatpush.msra.mxu0 %v507
      %529 = vmatmul.f32.gmra.mxu0 %v511
      %v530 = vpop.f32.mrf.mxu0
      %v531 = vadd.f32 0.0, %v530
      %532 = vdwg.mxu0
      %v533 = vmul.f32 %v531, %v505
      %v534 = vld [vmem:[%s5] sm:$0xff]
      %v535 = vld [vmem:[%s5 + $0x8] sm:$0xff]
      %v536 = vld [vmem:[%s5 + $0x10] sm:$0xff]
      %v537 = vld [vmem:[%s5 + $0x18] sm:$0xff]
      %v538 = vld [vmem:[%s6] sm:$0xff]
      %v539 = vld [vmem:[%s6 + $0x8] sm:$0xff]
      %v540 = vld [vmem:[%s6 + $0x10] sm:$0xff]
      %v541 = vld [vmem:[%s6 + $0x18] sm:$0xff]
      %543 = vset.pattern.permute.xlu0 0
      %544 = vperm.xlu0 %543, %v538
      %v545 = vpop.permute.xlu0 %544
      %548 = vset.pattern.permute.xlu0 0
      %549 = vperm.xlu0 %548, %v539
      %v550 = vpop.permute.xlu0 %549
      %553 = vset.pattern.permute.xlu0 0
      %554 = vperm.xlu0 %553, %v540
      %v555 = vpop.permute.xlu0 %554
      %558 = vset.pattern.permute.xlu0 0
      %559 = vperm.xlu0 %558, %v541
      %v560 = vpop.permute.xlu0 %559
      %vm562 = vcmask 31744
      %v564 = vsel %vm562, %v534, 0
      %v567 = vsel %vm562, %v535, 0
      %v570 = vsel %vm562, %v536, 0
      %v573 = vsel %vm562, %v537, 0
      %vm575 = vcmask 1043456
      %v577 = vsel %vm575, %v533, 0
      %579 = vmatpush.msra.mxu0 0.0
      %580 = vmatpush.msra.mxu0 0.0
      %581 = vmatpush.msra.mxu0 0.0
      %582 = vmatpush.msra.mxu0 0.0
      %583 = vmatpush.msra.mxu0 0.0
      %584 = vmatpush.msra.mxu0 0.0
      %585 = vmatpush.msra.mxu0 0.0
      %586 = vmatpush.msra.mxu0 0.0
      %587 = vmatpush.msra.mxu0 0.0
      %588 = vmatpush.msra.mxu0 0.0
      %589 = vmatpush.msra.mxu0 0.0
      %590 = vmatpush.msra.mxu0 0.0
      %591 = vmatpush.msra.mxu0 0.0
      %592 = vmatpush.msra.mxu0 0.0
      %593 = vmatpush.msra.mxu0 0.0
      %594 = vmatpush.msra.mxu0 %v577
      %595 = vmatmul.f32.gmra.mxu0 %v564
      %v596 = vpop.f32.mrf.mxu0
      %v597 = vadd.f32 %v545, %v596
      %598 = vmatmul.f32.gmra.mxu0 %v567
      %v599 = vpop.f32.mrf.mxu0
      %v600 = vadd.f32 %v550, %v599
      %601 = vmatmul.f32.gmra.mxu0 %v570
      %v602 = vpop.f32.mrf.mxu0
      %v603 = vadd.f32 %v555, %v602
      %604 = vmatmul.f32.gmra.mxu0 %v573
      %v605 = vpop.f32.mrf.mxu0
      %v606 = vadd.f32 %v560, %v605
      %607 = vdwg.mxu0
      %v608 = vmul.f32 %v597, %v505
      %v609 = vmul.f32 %v600, %v505
      %v610 = vmul.f32 %v603, %v505
      %v611 = vmul.f32 %v606, %v505
      %vm612 = vcmask 80896
      %613 = vst.msk [vmem:[#allocation2] sm:$0xff] %vm612, 0.0
      %614 = vst.msk [vmem:[#allocation2 + $0x8] sm:$0xff] %vm612, 0.0
      %615 = vst.msk [vmem:[#allocation2 + $0x10] sm:$0xff] %vm612, 0.0
      %616 = vst.msk [vmem:[#allocation2 + $0x18] sm:$0xff] %vm612, 0.0
      %621 = vrot.lane.b32.xlu0 %v608, 1
      %v622 = vpop.permute.xlu0 %621
      %623 = vrot.lane.b32.xlu0 %v609, 1
      %v624 = vpop.permute.xlu0 %623
      %625 = vrot.lane.b32.xlu0 %v610, 1
      %v626 = vpop.permute.xlu0 %625
      %627 = vrot.lane.b32.xlu0 %v611, 1
      %v628 = vpop.permute.xlu0 %627
      %vm633 = vcmask 72712
      %634 = vst.msk [vmem:[#allocation2] sm:$0xff] %vm633, %v622
      %635 = vst.msk [vmem:[#allocation2 + $0x8] sm:$0xff] %vm633, %v624
      %636 = vst.msk [vmem:[#allocation2 + $0x10] sm:$0xff] %vm633, %v626
      %637 = vst.msk [vmem:[#allocation2 + $0x18] sm:$0xff] %vm633, %v628
      %v638 = vld [vmem:[#allocation2] sm:$0xff]
      %v639 = vld [vmem:[#allocation2 + $0x8] sm:$0xff]
      %v640 = vld [vmem:[#allocation2 + $0x10] sm:$0xff]
      %v641 = vld [vmem:[#allocation2 + $0x18] sm:$0xff]
      %646 = vrot.lane.b32.xlu0 %v638, 127
      %v647 = vpop.permute.xlu0 %646
      %648 = vrot.lane.b32.xlu0 %v639, 127
      %v649 = vpop.permute.xlu0 %648
      %650 = vrot.lane.b32.xlu0 %v640, 127
      %v651 = vpop.permute.xlu0 %650
      %652 = vrot.lane.b32.xlu0 %v641, 127
      %v653 = vpop.permute.xlu0 %652
      %658 = vrot.lane.b32.xlu0 %v638, 126
      %v659 = vpop.permute.xlu0 %658
      %660 = vrot.lane.b32.xlu0 %v639, 126
      %v661 = vpop.permute.xlu0 %660
      %662 = vrot.lane.b32.xlu0 %v640, 126
      %v663 = vpop.permute.xlu0 %662
      %664 = vrot.lane.b32.xlu0 %v641, 126
      %v665 = vpop.permute.xlu0 %664
      %v670 = vld [vmem:[%s7] sm:$0xff]
      %v671 = vld [vmem:[%s7 + $0x8] sm:$0xff]
      %v672 = vld [vmem:[%s7 + $0x10] sm:$0xff]
      %v673 = vld [vmem:[%s7 + $0x18] sm:$0xff]
      %v674 = vld [vmem:[%s7 + $0x20] sm:$0xff]
      %v675 = vld [vmem:[%s7 + $0x28] sm:$0xff]
      %v676 = vld [vmem:[%s7 + $0x30] sm:$0xff]
      %v677 = vld [vmem:[%s7 + $0x38] sm:$0xff]
      %v678 = vld [vmem:[%s8] sm:$0xff]
      %v679 = vld [vmem:[%s8 + $0x8] sm:$0xff]
      %v680 = vld [vmem:[%s8 + $0x10] sm:$0xff]
      %v681 = vld [vmem:[%s8 + $0x18] sm:$0xff]
      %v682 = vld [vmem:[%s8 + $0x20] sm:$0xff]
      %v683 = vld [vmem:[%s8 + $0x28] sm:$0xff]
      %v684 = vld [vmem:[%s8 + $0x30] sm:$0xff]
      %v685 = vld [vmem:[%s8 + $0x38] sm:$0xff]
      %687 = vset.pattern.permute.xlu0 0
      %688 = vperm.xlu0 %687, %v678
      %v689 = vpop.permute.xlu0 %688
      %692 = vset.pattern.permute.xlu0 0
      %693 = vperm.xlu0 %692, %v679
      %v694 = vpop.permute.xlu0 %693
      %697 = vset.pattern.permute.xlu0 0
      %698 = vperm.xlu0 %697, %v680
      %v699 = vpop.permute.xlu0 %698
      %702 = vset.pattern.permute.xlu0 0
      %703 = vperm.xlu0 %702, %v681
      %v704 = vpop.permute.xlu0 %703
      %707 = vset.pattern.permute.xlu0 0
      %708 = vperm.xlu0 %707, %v682
      %v709 = vpop.permute.xlu0 %708
      %712 = vset.pattern.permute.xlu0 0
      %713 = vperm.xlu0 %712, %v683
      %v714 = vpop.permute.xlu0 %713
      %717 = vset.pattern.permute.xlu0 0
      %718 = vperm.xlu0 %717, %v684
      %v719 = vpop.permute.xlu0 %718
      %722 = vset.pattern.permute.xlu0 0
      %723 = vperm.xlu0 %722, %v685
      %v724 = vpop.permute.xlu0 %723
      %vm726 = vcmask 785408
      %v728 = vsel %vm726, %v670, 0
      %v731 = vsel %vm726, %v671, 0
      %v734 = vsel %vm726, %v672, 0
      %v737 = vsel %vm726, %v673, 0
      %v740 = vsel %vm726, %v674, 0
      %v743 = vsel %vm726, %v675, 0
      %v746 = vsel %vm726, %v676, 0
      %v749 = vsel %vm726, %v677, 0
      %751 = vmatpush.msra.mxu0 0.0
      %752 = vmatpush.msra.mxu0 0.0
      %753 = vmatpush.msra.mxu0 0.0
      %754 = vmatpush.msra.mxu0 0.0
      %755 = vmatpush.msra.mxu0 %v665
      %756 = vmatpush.msra.mxu0 %v663
      %757 = vmatpush.msra.mxu0 %v661
      %758 = vmatpush.msra.mxu0 %v659
      %759 = vmatpush.msra.mxu0 %v653
      %760 = vmatpush.msra.mxu0 %v651
      %761 = vmatpush.msra.mxu0 %v649
      %762 = vmatpush.msra.mxu0 %v647
      %763 = vmatpush.msra.mxu0 %v641
      %764 = vmatpush.msra.mxu0 %v640
      %765 = vmatpush.msra.mxu0 %v639
      %766 = vmatpush.msra.mxu0 %v638
      %767 = vmatmul.f32.gmra.mxu0 %v728
      %v768 = vpop.f32.mrf.mxu0
      %v769 = vadd.f32 %v689, %v768
      %770 = vmatmul.f32.gmra.mxu0 %v731
      %v771 = vpop.f32.mrf.mxu0
      %v772 = vadd.f32 %v694, %v771
      %773 = vmatmul.f32.gmra.mxu0 %v734
      %v774 = vpop.f32.mrf.mxu0
      %v775 = vadd.f32 %v699, %v774
      %776 = vmatmul.f32.gmra.mxu0 %v737
      %v777 = vpop.f32.mrf.mxu0
      %v778 = vadd.f32 %v704, %v777
      %779 = vmatmul.f32.gmra.mxu0 %v740
      %v780 = vpop.f32.mrf.mxu0
      %v781 = vadd.f32 %v709, %v780
      %782 = vmatmul.f32.gmra.mxu0 %v743
      %v783 = vpop.f32.mrf.mxu0
      %v784 = vadd.f32 %v714, %v783
      %785 = vmatmul.f32.gmra.mxu0 %v746
      %v786 = vpop.f32.mrf.mxu0
      %v787 = vadd.f32 %v719, %v786
      %788 = vmatmul.f32.gmra.mxu0 %v749
      %v789 = vpop.f32.mrf.mxu0
      %v790 = vadd.f32 %v724, %v789
      %791 = vdwg.mxu0
      %v792 = vtanh.pop %v769
      %v793 = vtanh.pop %v772
      %v794 = vtanh.pop %v775
      %v795 = vtanh.pop %v778
      %v796 = vxor.u32 %v781, 2147483648
      %v797 = vxor.u32 %v784, 2147483648
      %v798 = vxor.u32 %v787, 2147483648
      %v799 = vxor.u32 %v790, 2147483648
      %v800 = vmul.f32 %v796, 1.442695
      %v801 = vpow.pop %v800
      %v802 = vmul.f32 %v797, 1.442695
      %v803 = vpow.pop %v802
      %v804 = vmul.f32 %v798, 1.442695
      %v805 = vpow.pop %v804
      %v806 = vmul.f32 %v799, 1.442695
      %v807 = vpow.pop %v806
      %v808 = vadd.f32 %v801, 1.0
      %v809 = vadd.f32 %v803, 1.0
      %v810 = vadd.f32 %v805, 1.0
      %v811 = vadd.f32 %v807, 1.0
      %v812 = vrcp.pop %v808
      %v813 = vmul.f32 %v808, %v812
      %v814 = vsub.f32 1.0, %v813
      %v815 = vmul.f32 %v812, %v814
      %v816 = vadd.f32 %v812, %v815
      %vm817 = vweird.f32 %v808
      %vm818 = vweird.f32 %v812
      %vm819 = vmor %vm817, %vm818
      %v820 = vsel %vm819, %v812, %v816
      %v821 = vand.u32 2147483647, %v808
      %vm822 = vcmp.eq.f32.partialorder %v821, 8.507059e+37
      %v823 = vand.u32 %v808, 2147483648
      %v824 = vor.u32 1.1754944e-38, %v823
      %v825 = vsel %vm822, %v824, %v820
      %v826 = vmul.f32 1.0, %v825
      %v827 = vrcp.pop %v809
      %v828 = vmul.f32 %v809, %v827
      %v829 = vsub.f32 1.0, %v828
      %v830 = vmul.f32 %v827, %v829
      %v831 = vadd.f32 %v827, %v830
      %vm832 = vweird.f32 %v809
      %vm833 = vweird.f32 %v827
      %vm834 = vmor %vm832, %vm833
      %v835 = vsel %vm834, %v827, %v831
      %v836 = vand.u32 2147483647, %v809
      %vm837 = vcmp.eq.f32.partialorder %v836, 8.507059e+37
      %v838 = vand.u32 %v809, 2147483648
      %v839 = vor.u32 1.1754944e-38, %v838
      %v840 = vsel %vm837, %v839, %v835
      %v841 = vmul.f32 1.0, %v840
      %v842 = vrcp.pop %v810
      %v843 = vmul.f32 %v810, %v842
      %v844 = vsub.f32 1.0, %v843
      %v845 = vmul.f32 %v842, %v844
      %v846 = vadd.f32 %v842, %v845
      %vm847 = vweird.f32 %v810
      %vm848 = vweird.f32 %v842
      %vm849 = vmor %vm847, %vm848
      %v850 = vsel %vm849, %v842, %v846
      %v851 = vand.u32 2147483647, %v810
      %vm852 = vcmp.eq.f32.partialorder %v851, 8.507059e+37
      %v853 = vand.u32 %v810, 2147483648
      %v854 = vor.u32 1.1754944e-38, %v853
      %v855 = vsel %vm852, %v854, %v850
      %v856 = vmul.f32 1.0, %v855
      %v857 = vrcp.pop %v811
      %v858 = vmul.f32 %v811, %v857
      %v859 = vsub.f32 1.0, %v858
      %v860 = vmul.f32 %v857, %v859
      %v861 = vadd.f32 %v857, %v860
      %vm862 = vweird.f32 %v811
      %vm863 = vweird.f32 %v857
      %vm864 = vmor %vm862, %vm863
      %v865 = vsel %vm864, %v857, %v861
      %v866 = vand.u32 2147483647, %v811
      %vm867 = vcmp.eq.f32.partialorder %v866, 8.507059e+37
      %v868 = vand.u32 %v811, 2147483648
      %v869 = vor.u32 1.1754944e-38, %v868
      %v870 = vsel %vm867, %v869, %v865
      %v871 = vmul.f32 1.0, %v870
      %v872 = vmul.f32 %v792, %v826
      %v873 = vmul.f32 %v793, %v841
      %v874 = vmul.f32 %v794, %v856
      %v875 = vmul.f32 %v795, %v871
      %v876 = vld [vmem:[%s9] sm:$0xff]
      %v877 = vld [vmem:[%s9 + $0x8] sm:$0xff]
      %v878 = vld [vmem:[%s9 + $0x10] sm:$0xff]
      %v879 = vld [vmem:[%s9 + $0x18] sm:$0xff]
      %v880 = vld [vmem:[%s9 + $0x20] sm:$0xff]
      %v881 = vld [vmem:[%s9 + $0x28] sm:$0xff]
      %v882 = vld [vmem:[%s9 + $0x30] sm:$0xff]
      %v883 = vld [vmem:[%s9 + $0x38] sm:$0xff]
      %v884 = vld [vmem:[%s10] sm:$0xff]
      %v885 = vld [vmem:[%s10 + $0x8] sm:$0xff]
      %v886 = vld [vmem:[%s10 + $0x10] sm:$0xff]
      %v887 = vld [vmem:[%s10 + $0x18] sm:$0xff]
      %v888 = vld [vmem:[%s10 + $0x20] sm:$0xff]
      %v889 = vld [vmem:[%s10 + $0x28] sm:$0xff]
      %v890 = vld [vmem:[%s10 + $0x30] sm:$0xff]
      %v891 = vld [vmem:[%s10 + $0x38] sm:$0xff]
      %893 = vset.pattern.permute.xlu0 0
      %894 = vperm.xlu0 %893, %v884
      %v895 = vpop.permute.xlu0 %894
      %898 = vset.pattern.permute.xlu0 0
      %899 = vperm.xlu0 %898, %v885
      %v900 = vpop.permute.xlu0 %899
      %903 = vset.pattern.permute.xlu0 0
      %904 = vperm.xlu0 %903, %v886
      %v905 = vpop.permute.xlu0 %904
      %908 = vset.pattern.permute.xlu0 0
      %909 = vperm.xlu0 %908, %v887
      %v910 = vpop.permute.xlu0 %909
      %913 = vset.pattern.permute.xlu0 0
      %914 = vperm.xlu0 %913, %v888
      %v915 = vpop.permute.xlu0 %914
      %918 = vset.pattern.permute.xlu0 0
      %919 = vperm.xlu0 %918, %v889
      %v920 = vpop.permute.xlu0 %919
      %923 = vset.pattern.permute.xlu0 0
      %924 = vperm.xlu0 %923, %v890
      %v925 = vpop.permute.xlu0 %924
      %928 = vset.pattern.permute.xlu0 0
      %929 = vperm.xlu0 %928, %v891
      %v930 = vpop.permute.xlu0 %929
      %vm932 = vcmask 261120
      %v934 = vsel %vm932, %v876, 0
      %v937 = vsel %vm932, %v877, 0
      %v940 = vsel %vm932, %v878, 0
      %v943 = vsel %vm932, %v879, 0
      %v946 = vsel %vm932, %v880, 0
      %v949 = vsel %vm932, %v881, 0
      %v952 = vsel %vm932, %v882, 0
      %v955 = vsel %vm932, %v883, 0
      %957 = vmatpush.msra.mxu0 0.0
      %958 = vmatpush.msra.mxu0 0.0
      %959 = vmatpush.msra.mxu0 0.0
      %960 = vmatpush.msra.mxu0 0.0
      %961 = vmatpush.msra.mxu0 0.0
      %962 = vmatpush.msra.mxu0 0.0
      %963 = vmatpush.msra.mxu0 0.0
      %964 = vmatpush.msra.mxu0 0.0
      %965 = vmatpush.msra.mxu0 0.0
      %966 = vmatpush.msra.mxu0 0.0
      %967 = vmatpush.msra.mxu0 0.0
      %968 = vmatpush.msra.mxu0 0.0
      %969 = vmatpush.msra.mxu0 %v875
      %970 = vmatpush.msra.mxu0 %v874
      %971 = vmatpush.msra.mxu0 %v873
      %972 = vmatpush.msra.mxu0 %v872
      %973 = vmatmul.f32.gmra.mxu0 %v934
      %v974 = vpop.f32.mrf.mxu0
      %v975 = vadd.f32 %v895, %v974
      %976 = vmatmul.f32.gmra.mxu0 %v937
      %v977 = vpop.f32.mrf.mxu0
      %v978 = vadd.f32 %v900, %v977
      %979 = vmatmul.f32.gmra.mxu0 %v940
      %v980 = vpop.f32.mrf.mxu0
      %v981 = vadd.f32 %v905, %v980
      %982 = vmatmul.f32.gmra.mxu0 %v943
      %v983 = vpop.f32.mrf.mxu0
      %v984 = vadd.f32 %v910, %v983
      %985 = vmatmul.f32.gmra.mxu0 %v946
      %v986 = vpop.f32.mrf.mxu0
      %v987 = vadd.f32 %v915, %v986
      %988 = vmatmul.f32.gmra.mxu0 %v949
      %v989 = vpop.f32.mrf.mxu0
      %v990 = vadd.f32 %v920, %v989
      %991 = vmatmul.f32.gmra.mxu0 %v952
      %v992 = vpop.f32.mrf.mxu0
      %v993 = vadd.f32 %v925, %v992
      %994 = vmatmul.f32.gmra.mxu0 %v955
      %v995 = vpop.f32.mrf.mxu0
      %v996 = vadd.f32 %v930, %v995
      %997 = vdwg.mxu0
      %v998 = vadd.f32 %v608, %v975
      %v999 = vadd.f32 %v609, %v978
      %v1000 = vadd.f32 %v610, %v981
      %v1001 = vadd.f32 %v611, %v984
      %v1002 = vmul.f32 %v998, %v505
      %v1003 = vmul.f32 %v999, %v505
      %v1004 = vmul.f32 %v1000, %v505
      %v1005 = vmul.f32 %v1001, %v505
      %v1006 = vadd.f32 %v987, 0.0
      %v1007 = vadd.f32 %v990, 0.0
      %v1008 = vadd.f32 %v993, 0.0
      %v1009 = vadd.f32 %v996, 0.0
      %1014 = vrot.lane.b32.xlu0 %v1002, 1
      %v1015 = vpop.permute.xlu0 %1014
      %1016 = vrot.lane.b32.xlu0 %v1003, 1
      %v1017 = vpop.permute.xlu0 %1016
      %1018 = vrot.lane.b32.xlu0 %v1004, 1
      %v1019 = vpop.permute.xlu0 %1018
      %1020 = vrot.lane.b32.xlu0 %v1005, 1
      %v1021 = vpop.permute.xlu0 %1020
      %1026 = vst.msk [vmem:[#allocation2] sm:$0xff] %vm633, %v1015
      %1027 = vst.msk [vmem:[#allocation2 + $0x8] sm:$0xff] %vm633, %v1017
      %1028 = vst.msk [vmem:[#allocation2 + $0x10] sm:$0xff] %vm633, %v1019
      %1029 = vst.msk [vmem:[#allocation2 + $0x18] sm:$0xff] %vm633, %v1021
      %v1030 = vld [vmem:[#allocation2] sm:$0xff]
      %v1031 = vld [vmem:[#allocation2 + $0x8] sm:$0xff]
      %v1032 = vld [vmem:[#allocation2 + $0x10] sm:$0xff]
      %v1033 = vld [vmem:[#allocation2 + $0x18] sm:$0xff]
      %1038 = vrot.lane.b32.xlu0 %v1030, 127
      %v1039 = vpop.permute.xlu0 %1038
      %1040 = vrot.lane.b32.xlu0 %v1031, 127
      %v1041 = vpop.permute.xlu0 %1040
      %1042 = vrot.lane.b32.xlu0 %v1032, 127
      %v1043 = vpop.permute.xlu0 %1042
      %1044 = vrot.lane.b32.xlu0 %v1033, 127
      %v1045 = vpop.permute.xlu0 %1044
      %1050 = vrot.lane.b32.xlu0 %v1030, 126
      %v1051 = vpop.permute.xlu0 %1050
      %1052 = vrot.lane.b32.xlu0 %v1031, 126
      %v1053 = vpop.permute.xlu0 %1052
      %1054 = vrot.lane.b32.xlu0 %v1032, 126
      %v1055 = vpop.permute.xlu0 %1054
      %1056 = vrot.lane.b32.xlu0 %v1033, 126
      %v1057 = vpop.permute.xlu0 %1056
      %s1062 = scalar_lea.vmem %s7, 64
      %v1063 = vld [vmem:[%s1062] sm:$0xff]
      %v1064 = vld [vmem:[%s1062 + $0x8] sm:$0xff]
      %v1065 = vld [vmem:[%s1062 + $0x10] sm:$0xff]
      %v1066 = vld [vmem:[%s1062 + $0x18] sm:$0xff]
      %v1067 = vld [vmem:[%s1062 + $0x20] sm:$0xff]
      %v1068 = vld [vmem:[%s1062 + $0x28] sm:$0xff]
      %v1069 = vld [vmem:[%s1062 + $0x30] sm:$0xff]
      %v1070 = vld [vmem:[%s1062 + $0x38] sm:$0xff]
      %s1071 = scalar_lea.vmem %s8, 64
      %v1072 = vld [vmem:[%s1071] sm:$0xff]
      %v1073 = vld [vmem:[%s1071 + $0x8] sm:$0xff]
      %v1074 = vld [vmem:[%s1071 + $0x10] sm:$0xff]
      %v1075 = vld [vmem:[%s1071 + $0x18] sm:$0xff]
      %v1076 = vld [vmem:[%s1071 + $0x20] sm:$0xff]
      %v1077 = vld [vmem:[%s1071 + $0x28] sm:$0xff]
      %v1078 = vld [vmem:[%s1071 + $0x30] sm:$0xff]
      %v1079 = vld [vmem:[%s1071 + $0x38] sm:$0xff]
      %1081 = vset.pattern.permute.xlu0 0
      %1082 = vperm.xlu0 %1081, %v1072
      %v1083 = vpop.permute.xlu0 %1082
      %1086 = vset.pattern.permute.xlu0 0
      %1087 = vperm.xlu0 %1086, %v1073
      %v1088 = vpop.permute.xlu0 %1087
      %1091 = vset.pattern.permute.xlu0 0
      %1092 = vperm.xlu0 %1091, %v1074
      %v1093 = vpop.permute.xlu0 %1092
      %1096 = vset.pattern.permute.xlu0 0
      %1097 = vperm.xlu0 %1096, %v1075
      %v1098 = vpop.permute.xlu0 %1097
      %1101 = vset.pattern.permute.xlu0 0
      %1102 = vperm.xlu0 %1101, %v1076
      %v1103 = vpop.permute.xlu0 %1102
      %1106 = vset.pattern.permute.xlu0 0
      %1107 = vperm.xlu0 %1106, %v1077
      %v1108 = vpop.permute.xlu0 %1107
      %1111 = vset.pattern.permute.xlu0 0
      %1112 = vperm.xlu0 %1111, %v1078
      %v1113 = vpop.permute.xlu0 %1112
      %1116 = vset.pattern.permute.xlu0 0
      %1117 = vperm.xlu0 %1116, %v1079
      %v1118 = vpop.permute.xlu0 %1117
      %v1121 = vsel %vm726, %v1063, 0
      %v1124 = vsel %vm726, %v1064, 0
      %v1127 = vsel %vm726, %v1065, 0
      %v1130 = vsel %vm726, %v1066, 0
      %v1133 = vsel %vm726, %v1067, 0
      %v1136 = vsel %vm726, %v1068, 0
      %v1139 = vsel %vm726, %v1069, 0
      %v1142 = vsel %vm726, %v1070, 0
      %1144 = vmatpush.msra.mxu0 0.0
      %1145 = vmatpush.msra.mxu0 0.0
      %1146 = vmatpush.msra.mxu0 0.0
      %1147 = vmatpush.msra.mxu0 0.0
      %1148 = vmatpush.msra.mxu0 %v1057
      %1149 = vmatpush.msra.mxu0 %v1055
      %1150 = vmatpush.msra.mxu0 %v1053
      %1151 = vmatpush.msra.mxu0 %v1051
      %1152 = vmatpush.msra.mxu0 %v1045
      %1153 = vmatpush.msra.mxu0 %v1043
      %1154 = vmatpush.msra.mxu0 %v1041
      %1155 = vmatpush.msra.mxu0 %v1039
      %1156 = vmatpush.msra.mxu0 %v1033
      %1157 = vmatpush.msra.mxu0 %v1032
      %1158 = vmatpush.msra.mxu0 %v1031
      %1159 = vmatpush.msra.mxu0 %v1030
      %1160 = vmatmul.f32.gmra.mxu0 %v1121
      %v1161 = vpop.f32.mrf.mxu0
      %v1162 = vadd.f32 %v1083, %v1161
      %1163 = vmatmul.f32.gmra.mxu0 %v1124
      %v1164 = vpop.f32.mrf.mxu0
      %v1165 = vadd.f32 %v1088, %v1164
      %1166 = vmatmul.f32.gmra.mxu0 %v1127
      %v1167 = vpop.f32.mrf.mxu0
      %v1168 = vadd.f32 %v1093, %v1167
      %1169 = vmatmul.f32.gmra.mxu0 %v1130
      %v1170 = vpop.f32.mrf.mxu0
      %v1171 = vadd.f32 %v1098, %v1170
      %1172 = vmatmul.f32.gmra.mxu0 %v1133
      %v1173 = vpop.f32.mrf.mxu0
      %v1174 = vadd.f32 %v1103, %v1173
      %1175 = vmatmul.f32.gmra.mxu0 %v1136
      %v1176 = vpop.f32.mrf.mxu0
      %v1177 = vadd.f32 %v1108, %v1176
      %1178 = vmatmul.f32.gmra.mxu0 %v1139
      %v1179 = vpop.f32.mrf.mxu0
      %v1180 = vadd.f32 %v1113, %v1179
      %1181 = vmatmul.f32.gmra.mxu0 %v1142
      %v1182 = vpop.f32.mrf.mxu0
      %v1183 = vadd.f32 %v1118, %v1182
      %1184 = vdwg.mxu0
      %v1185 = vtanh.pop %v1162
      %v1186 = vtanh.pop %v1165
      %v1187 = vtanh.pop %v1168
      %v1188 = vtanh.pop %v1171
      %v1189 = vxor.u32 %v1174, 2147483648
      %v1190 = vxor.u32 %v1177, 2147483648
      %v1191 = vxor.u32 %v1180, 2147483648
      %v1192 = vxor.u32 %v1183, 2147483648
      %v1193 = vmul.f32 %v1189, 1.442695
      %v1194 = vpow.pop %v1193
      %v1195 = vmul.f32 %v1190, 1.442695
      %v1196 = vpow.pop %v1195
      %v1197 = vmul.f32 %v1191, 1.442695
      %v1198 = vpow.pop %v1197
      %v1199 = vmul.f32 %v1192, 1.442695
      %v1200 = vpow.pop %v1199
      %v1201 = vadd.f32 %v1194, 1.0
      %v1202 = vadd.f32 %v1196, 1.0
      %v1203 = vadd.f32 %v1198, 1.0
      %v1204 = vadd.f32 %v1200, 1.0
      %v1205 = vrcp.pop %v1201
      %v1206 = vmul.f32 %v1201, %v1205
      %v1207 = vsub.f32 1.0, %v1206
      %v1208 = vmul.f32 %v1205, %v1207
      %v1209 = vadd.f32 %v1205, %v1208
      %vm1210 = vweird.f32 %v1201
      %vm1211 = vweird.f32 %v1205
      %vm1212 = vmor %vm1210, %vm1211
      %v1213 = vsel %vm1212, %v1205, %v1209
      %v1214 = vand.u32 2147483647, %v1201
      %vm1215 = vcmp.eq.f32.partialorder %v1214, 8.507059e+37
      %v1216 = vand.u32 %v1201, 2147483648
      %v1217 = vor.u32 1.1754944e-38, %v1216
      %v1218 = vsel %vm1215, %v1217, %v1213
      %v1219 = vmul.f32 1.0, %v1218
      %v1220 = vrcp.pop %v1202
      %v1221 = vmul.f32 %v1202, %v1220
      %v1222 = vsub.f32 1.0, %v1221
      %v1223 = vmul.f32 %v1220, %v1222
      %v1224 = vadd.f32 %v1220, %v1223
      %vm1225 = vweird.f32 %v1202
      %vm1226 = vweird.f32 %v1220
      %vm1227 = vmor %vm1225, %vm1226
      %v1228 = vsel %vm1227, %v1220, %v1224
      %v1229 = vand.u32 2147483647, %v1202
      %vm1230 = vcmp.eq.f32.partialorder %v1229, 8.507059e+37
      %v1231 = vand.u32 %v1202, 2147483648
      %v1232 = vor.u32 1.1754944e-38, %v1231
      %v1233 = vsel %vm1230, %v1232, %v1228
      %v1234 = vmul.f32 1.0, %v1233
      %v1235 = vrcp.pop %v1203
      %v1236 = vmul.f32 %v1203, %v1235
      %v1237 = vsub.f32 1.0, %v1236
      %v1238 = vmul.f32 %v1235, %v1237
      %v1239 = vadd.f32 %v1235, %v1238
      %vm1240 = vweird.f32 %v1203
      %vm1241 = vweird.f32 %v1235
      %vm1242 = vmor %vm1240, %vm1241
      %v1243 = vsel %vm1242, %v1235, %v1239
      %v1244 = vand.u32 2147483647, %v1203
      %vm1245 = vcmp.eq.f32.partialorder %v1244, 8.507059e+37
      %v1246 = vand.u32 %v1203, 2147483648
      %v1247 = vor.u32 1.1754944e-38, %v1246
      %v1248 = vsel %vm1245, %v1247, %v1243
      %v1249 = vmul.f32 1.0, %v1248
      %v1250 = vrcp.pop %v1204
      %v1251 = vmul.f32 %v1204, %v1250
      %v1252 = vsub.f32 1.0, %v1251
      %v1253 = vmul.f32 %v1250, %v1252
      %v1254 = vadd.f32 %v1250, %v1253
      %vm1255 = vweird.f32 %v1204
      %vm1256 = vweird.f32 %v1250
      %vm1257 = vmor %vm1255, %vm1256
      %v1258 = vsel %vm1257, %v1250, %v1254
      %v1259 = vand.u32 2147483647, %v1204
      %vm1260 = vcmp.eq.f32.partialorder %v1259, 8.507059e+37
      %v1261 = vand.u32 %v1204, 2147483648
      %v1262 = vor.u32 1.1754944e-38, %v1261
      %v1263 = vsel %vm1260, %v1262, %v1258
      %v1264 = vmul.f32 1.0, %v1263
      %v1265 = vmul.f32 %v1185, %v1219
      %v1266 = vmul.f32 %v1186, %v1234
      %v1267 = vmul.f32 %v1187, %v1249
      %v1268 = vmul.f32 %v1188, %v1264
      %s1269 = scalar_lea.vmem %s9, 64
      %v1270 = vld [vmem:[%s1269] sm:$0xff]
      %v1271 = vld [vmem:[%s1269 + $0x8] sm:$0xff]
      %v1272 = vld [vmem:[%s1269 + $0x10] sm:$0xff]
      %v1273 = vld [vmem:[%s1269 + $0x18] sm:$0xff]
      %v1274 = vld [vmem:[%s1269 + $0x20] sm:$0xff]
      %v1275 = vld [vmem:[%s1269 + $0x28] sm:$0xff]
      %v1276 = vld [vmem:[%s1269 + $0x30] sm:$0xff]
      %v1277 = vld [vmem:[%s1269 + $0x38] sm:$0xff]
      %s1278 = scalar_lea.vmem %s10, 64
      %v1279 = vld [vmem:[%s1278] sm:$0xff]
      %v1280 = vld [vmem:[%s1278 + $0x8] sm:$0xff]
      %v1281 = vld [vmem:[%s1278 + $0x10] sm:$0xff]
      %v1282 = vld [vmem:[%s1278 + $0x18] sm:$0xff]
      %v1283 = vld [vmem:[%s1278 + $0x20] sm:$0xff]
      %v1284 = vld [vmem:[%s1278 + $0x28] sm:$0xff]
      %v1285 = vld [vmem:[%s1278 + $0x30] sm:$0xff]
      %v1286 = vld [vmem:[%s1278 + $0x38] sm:$0xff]
      %1288 = vset.pattern.permute.xlu0 0
      %1289 = vperm.xlu0 %1288, %v1279
      %v1290 = vpop.permute.xlu0 %1289
      %1293 = vset.pattern.permute.xlu0 0
      %1294 = vperm.xlu0 %1293, %v1280
      %v1295 = vpop.permute.xlu0 %1294
      %1298 = vset.pattern.permute.xlu0 0
      %1299 = vperm.xlu0 %1298, %v1281
      %v1300 = vpop.permute.xlu0 %1299
      %1303 = vset.pattern.permute.xlu0 0
      %1304 = vperm.xlu0 %1303, %v1282
      %v1305 = vpop.permute.xlu0 %1304
      %1308 = vset.pattern.permute.xlu0 0
      %1309 = vperm.xlu0 %1308, %v1283
      %v1310 = vpop.permute.xlu0 %1309
      %1313 = vset.pattern.permute.xlu0 0
      %1314 = vperm.xlu0 %1313, %v1284
      %v1315 = vpop.permute.xlu0 %1314
      %1318 = vset.pattern.permute.xlu0 0
      %1319 = vperm.xlu0 %1318, %v1285
      %v1320 = vpop.permute.xlu0 %1319
      %1323 = vset.pattern.permute.xlu0 0
      %1324 = vperm.xlu0 %1323, %v1286
      %v1325 = vpop.permute.xlu0 %1324
      %v1328 = vsel %vm932, %v1270, 0
      %v1331 = vsel %vm932, %v1271, 0
      %v1334 = vsel %vm932, %v1272, 0
      %v1337 = vsel %vm932, %v1273, 0
      %v1340 = vsel %vm932, %v1274, 0
      %v1343 = vsel %vm932, %v1275, 0
      %v1346 = vsel %vm932, %v1276, 0
      %v1349 = vsel %vm932, %v1277, 0
      %1351 = vmatpush.msra.mxu0 0.0
      %1352 = vmatpush.msra.mxu0 0.0
      %1353 = vmatpush.msra.mxu0 0.0
      %1354 = vmatpush.msra.mxu0 0.0
      %1355 = vmatpush.msra.mxu0 0.0
      %1356 = vmatpush.msra.mxu0 0.0
      %1357 = vmatpush.msra.mxu0 0.0
      %1358 = vmatpush.msra.mxu0 0.0
      %1359 = vmatpush.msra.mxu0 0.0
      %1360 = vmatpush.msra.mxu0 0.0
      %1361 = vmatpush.msra.mxu0 0.0
      %1362 = vmatpush.msra.mxu0 0.0
      %1363 = vmatpush.msra.mxu0 %v1268
      %1364 = vmatpush.msra.mxu0 %v1267
      %1365 = vmatpush.msra.mxu0 %v1266
      %1366 = vmatpush.msra.mxu0 %v1265
      %1367 = vmatmul.f32.gmra.mxu0 %v1328
      %v1368 = vpop.f32.mrf.mxu0
      %v1369 = vadd.f32 %v1290, %v1368
      %1370 = vmatmul.f32.gmra.mxu0 %v1331
      %v1371 = vpop.f32.mrf.mxu0
      %v1372 = vadd.f32 %v1295, %v1371
      %1373 = vmatmul.f32.gmra.mxu0 %v1334
      %v1374 = vpop.f32.mrf.mxu0
      %v1375 = vadd.f32 %v1300, %v1374
      %1376 = vmatmul.f32.gmra.mxu0 %v1337
      %v1377 = vpop.f32.mrf.mxu0
      %v1378 = vadd.f32 %v1305, %v1377
      %1379 = vmatmul.f32.gmra.mxu0 %v1340
      %v1380 = vpop.f32.mrf.mxu0
      %v1381 = vadd.f32 %v1310, %v1380
      %1382 = vmatmul.f32.gmra.mxu0 %v1343
      %v1383 = vpop.f32.mrf.mxu0
      %v1384 = vadd.f32 %v1315, %v1383
      %1385 = vmatmul.f32.gmra.mxu0 %v1346
      %v1386 = vpop.f32.mrf.mxu0
      %v1387 = vadd.f32 %v1320, %v1386
      %1388 = vmatmul.f32.gmra.mxu0 %v1349
      %v1389 = vpop.f32.mrf.mxu0
      %v1390 = vadd.f32 %v1325, %v1389
      %1391 = vdwg.mxu0
      %v1392 = vadd.f32 %v1002, %v1369
      %v1393 = vadd.f32 %v1003, %v1372
      %v1394 = vadd.f32 %v1004, %v1375
      %v1395 = vadd.f32 %v1005, %v1378
      %v1396 = vmul.f32 %v1392, %v505
      %v1397 = vmul.f32 %v1393, %v505
      %v1398 = vmul.f32 %v1394, %v505
      %v1399 = vmul.f32 %v1395, %v505
      %v1400 = vadd.f32 %v1006, %v1381
      %v1401 = vadd.f32 %v1007, %v1384
      %v1402 = vadd.f32 %v1008, %v1387
      %v1403 = vadd.f32 %v1009, %v1390
      %1408 = vrot.lane.b32.xlu0 %v1396, 1
      %v1409 = vpop.permute.xlu0 %1408
      %1410 = vrot.lane.b32.xlu0 %v1397, 1
      %v1411 = vpop.permute.xlu0 %1410
      %1412 = vrot.lane.b32.xlu0 %v1398, 1
      %v1413 = vpop.permute.xlu0 %1412
      %1414 = vrot.lane.b32.xlu0 %v1399, 1
      %v1415 = vpop.permute.xlu0 %1414
      %1420 = vst.msk [vmem:[#allocation2] sm:$0xff] %vm633, %v1409
      %1421 = vst.msk [vmem:[#allocation2 + $0x8] sm:$0xff] %vm633, %v1411
      %1422 = vst.msk [vmem:[#allocation2 + $0x10] sm:$0xff] %vm633, %v1413
      %1423 = vst.msk [vmem:[#allocation2 + $0x18] sm:$0xff] %vm633, %v1415
      %v1424 = vld [vmem:[#allocation2] sm:$0xff]
      %v1425 = vld [vmem:[#allocation2 + $0x8] sm:$0xff]
      %v1426 = vld [vmem:[#allocation2 + $0x10] sm:$0xff]
      %v1427 = vld [vmem:[#allocation2 + $0x18] sm:$0xff]
      %1432 = vrot.lane.b32.xlu0 %v1424, 127
      %v1433 = vpop.permute.xlu0 %1432
      %1434 = vrot.lane.b32.xlu0 %v1425, 127
      %v1435 = vpop.permute.xlu0 %1434
      %1436 = vrot.lane.b32.xlu0 %v1426, 127
      %v1437 = vpop.permute.xlu0 %1436
      %1438 = vrot.lane.b32.xlu0 %v1427, 127
      %v1439 = vpop.permute.xlu0 %1438
      %1444 = vrot.lane.b32.xlu0 %v1424, 126
      %v1445 = vpop.permute.xlu0 %1444
      %1446 = vrot.lane.b32.xlu0 %v1425, 126
      %v1447 = vpop.permute.xlu0 %1446
      %1448 = vrot.lane.b32.xlu0 %v1426, 126
      %v1449 = vpop.permute.xlu0 %1448
      %1450 = vrot.lane.b32.xlu0 %v1427, 126
      %v1451 = vpop.permute.xlu0 %1450
      %s1456 = scalar_lea.vmem %s7, 128
      %v1457 = vld [vmem:[%s1456] sm:$0xff]
      %v1458 = vld [vmem:[%s1456 + $0x8] sm:$0xff]
      %v1459 = vld [vmem:[%s1456 + $0x10] sm:$0xff]
      %v1460 = vld [vmem:[%s1456 + $0x18] sm:$0xff]
      %v1461 = vld [vmem:[%s1456 + $0x20] sm:$0xff]
      %v1462 = vld [vmem:[%s1456 + $0x28] sm:$0xff]
      %v1463 = vld [vmem:[%s1456 + $0x30] sm:$0xff]
      %v1464 = vld [vmem:[%s1456 + $0x38] sm:$0xff]
      %s1465 = scalar_lea.vmem %s8, 128
      %v1466 = vld [vmem:[%s1465] sm:$0xff]
      %v1467 = vld [vmem:[%s1465 + $0x8] sm:$0xff]
      %v1468 = vld [vmem:[%s1465 + $0x10] sm:$0xff]
      %v1469 = vld [vmem:[%s1465 + $0x18] sm:$0xff]
      %v1470 = vld [vmem:[%s1465 + $0x20] sm:$0xff]
      %v1471 = vld [vmem:[%s1465 + $0x28] sm:$0xff]
      %v1472 = vld [vmem:[%s1465 + $0x30] sm:$0xff]
      %v1473 = vld [vmem:[%s1465 + $0x38] sm:$0xff]
      %1475 = vset.pattern.permute.xlu0 0
      %1476 = vperm.xlu0 %1475, %v1466
      %v1477 = vpop.permute.xlu0 %1476
      %1480 = vset.pattern.permute.xlu0 0
      %1481 = vperm.xlu0 %1480, %v1467
      %v1482 = vpop.permute.xlu0 %1481
      %1485 = vset.pattern.permute.xlu0 0
      %1486 = vperm.xlu0 %1485, %v1468
      %v1487 = vpop.permute.xlu0 %1486
      %1490 = vset.pattern.permute.xlu0 0
      %1491 = vperm.xlu0 %1490, %v1469
      %v1492 = vpop.permute.xlu0 %1491
      %1495 = vset.pattern.permute.xlu0 0
      %1496 = vperm.xlu0 %1495, %v1470
      %v1497 = vpop.permute.xlu0 %1496
      %1500 = vset.pattern.permute.xlu0 0
      %1501 = vperm.xlu0 %1500, %v1471
      %v1502 = vpop.permute.xlu0 %1501
      %1505 = vset.pattern.permute.xlu0 0
      %1506 = vperm.xlu0 %1505, %v1472
      %v1507 = vpop.permute.xlu0 %1506
      %1510 = vset.pattern.permute.xlu0 0
      %1511 = vperm.xlu0 %1510, %v1473
      %v1512 = vpop.permute.xlu0 %1511
      %v1515 = vsel %vm726, %v1457, 0
      %v1518 = vsel %vm726, %v1458, 0
      %v1521 = vsel %vm726, %v1459, 0
      %v1524 = vsel %vm726, %v1460, 0
      %v1527 = vsel %vm726, %v1461, 0
      %v1530 = vsel %vm726, %v1462, 0
      %v1533 = vsel %vm726, %v1463, 0
      %v1536 = vsel %vm726, %v1464, 0
      %1538 = vmatpush.msra.mxu0 0.0
      %1539 = vmatpush.msra.mxu0 0.0
      %1540 = vmatpush.msra.mxu0 0.0
      %1541 = vmatpush.msra.mxu0 0.0
      %1542 = vmatpush.msra.mxu0 %v1451
      %1543 = vmatpush.msra.mxu0 %v1449
      %1544 = vmatpush.msra.mxu0 %v1447
      %1545 = vmatpush.msra.mxu0 %v1445
      %1546 = vmatpush.msra.mxu0 %v1439
      %1547 = vmatpush.msra.mxu0 %v1437
      %1548 = vmatpush.msra.mxu0 %v1435
      %1549 = vmatpush.msra.mxu0 %v1433
      %1550 = vmatpush.msra.mxu0 %v1427
      %1551 = vmatpush.msra.mxu0 %v1426
      %1552 = vmatpush.msra.mxu0 %v1425
      %1553 = vmatpush.msra.mxu0 %v1424
      %1554 = vmatmul.f32.gmra.mxu0 %v1515
      %v1555 = vpop.f32.mrf.mxu0
      %v1556 = vadd.f32 %v1477, %v1555
      %1557 = vmatmul.f32.gmra.mxu0 %v1518
      %v1558 = vpop.f32.mrf.mxu0
      %v1559 = vadd.f32 %v1482, %v1558
      %1560 = vmatmul.f32.gmra.mxu0 %v1521
      %v1561 = vpop.f32.mrf.mxu0
      %v1562 = vadd.f32 %v1487, %v1561
      %1563 = vmatmul.f32.gmra.mxu0 %v1524
      %v1564 = vpop.f32.mrf.mxu0
      %v1565 = vadd.f32 %v1492, %v1564
      %1566 = vmatmul.f32.gmra.mxu0 %v1527
      %v1567 = vpop.f32.mrf.mxu0
      %v1568 = vadd.f32 %v1497, %v1567
      %1569 = vmatmul.f32.gmra.mxu0 %v1530
      %v1570 = vpop.f32.mrf.mxu0
      %v1571 = vadd.f32 %v1502, %v1570
      %1572 = vmatmul.f32.gmra.mxu0 %v1533
      %v1573 = vpop.f32.mrf.mxu0
      %v1574 = vadd.f32 %v1507, %v1573
      %1575 = vmatmul.f32.gmra.mxu0 %v1536
      %v1576 = vpop.f32.mrf.mxu0
      %v1577 = vadd.f32 %v1512, %v1576
      %1578 = vdwg.mxu0
      %v1579 = vtanh.pop %v1556
      %v1580 = vtanh.pop %v1559
      %v1581 = vtanh.pop %v1562
      %v1582 = vtanh.pop %v1565
      %v1583 = vxor.u32 %v1568, 2147483648
      %v1584 = vxor.u32 %v1571, 2147483648
      %v1585 = vxor.u32 %v1574, 2147483648
      %v1586 = vxor.u32 %v1577, 2147483648
      %v1587 = vmul.f32 %v1583, 1.442695
      %v1588 = vpow.pop %v1587
      %v1589 = vmul.f32 %v1584, 1.442695
      %v1590 = vpow.pop %v1589
      %v1591 = vmul.f32 %v1585, 1.442695
      %v1592 = vpow.pop %v1591
      %v1593 = vmul.f32 %v1586, 1.442695
      %v1594 = vpow.pop %v1593
      %v1595 = vadd.f32 %v1588, 1.0
      %v1596 = vadd.f32 %v1590, 1.0
      %v1597 = vadd.f32 %v1592, 1.0
      %v1598 = vadd.f32 %v1594, 1.0
      %v1599 = vrcp.pop %v1595
      %v1600 = vmul.f32 %v1595, %v1599
      %v1601 = vsub.f32 1.0, %v1600
      %v1602 = vmul.f32 %v1599, %v1601
      %v1603 = vadd.f32 %v1599, %v1602
      %vm1604 = vweird.f32 %v1595
      %vm1605 = vweird.f32 %v1599
      %vm1606 = vmor %vm1604, %vm1605
      %v1607 = vsel %vm1606, %v1599, %v1603
      %v1608 = vand.u32 2147483647, %v1595
      %vm1609 = vcmp.eq.f32.partialorder %v1608, 8.507059e+37
      %v1610 = vand.u32 %v1595, 2147483648
      %v1611 = vor.u32 1.1754944e-38, %v1610
      %v1612 = vsel %vm1609, %v1611, %v1607
      %v1613 = vmul.f32 1.0, %v1612
      %v1614 = vrcp.pop %v1596
      %v1615 = vmul.f32 %v1596, %v1614
      %v1616 = vsub.f32 1.0, %v1615
      %v1617 = vmul.f32 %v1614, %v1616
      %v1618 = vadd.f32 %v1614, %v1617
      %vm1619 = vweird.f32 %v1596
      %vm1620 = vweird.f32 %v1614
      %vm1621 = vmor %vm1619, %vm1620
      %v1622 = vsel %vm1621, %v1614, %v1618
      %v1623 = vand.u32 2147483647, %v1596
      %vm1624 = vcmp.eq.f32.partialorder %v1623, 8.507059e+37
      %v1625 = vand.u32 %v1596, 2147483648
      %v1626 = vor.u32 1.1754944e-38, %v1625
      %v1627 = vsel %vm1624, %v1626, %v1622
      %v1628 = vmul.f32 1.0, %v1627
      %v1629 = vrcp.pop %v1597
      %v1630 = vmul.f32 %v1597, %v1629
      %v1631 = vsub.f32 1.0, %v1630
      %v1632 = vmul.f32 %v1629, %v1631
      %v1633 = vadd.f32 %v1629, %v1632
      %vm1634 = vweird.f32 %v1597
      %vm1635 = vweird.f32 %v1629
      %vm1636 = vmor %vm1634, %vm1635
      %v1637 = vsel %vm1636, %v1629, %v1633
      %v1638 = vand.u32 2147483647, %v1597
      %vm1639 = vcmp.eq.f32.partialorder %v1638, 8.507059e+37
      %v1640 = vand.u32 %v1597, 2147483648
      %v1641 = vor.u32 1.1754944e-38, %v1640
      %v1642 = vsel %vm1639, %v1641, %v1637
      %v1643 = vmul.f32 1.0, %v1642
      %v1644 = vrcp.pop %v1598
      %v1645 = vmul.f32 %v1598, %v1644
      %v1646 = vsub.f32 1.0, %v1645
      %v1647 = vmul.f32 %v1644, %v1646
      %v1648 = vadd.f32 %v1644, %v1647
      %vm1649 = vweird.f32 %v1598
      %vm1650 = vweird.f32 %v1644
      %vm1651 = vmor %vm1649, %vm1650
      %v1652 = vsel %vm1651, %v1644, %v1648
      %v1653 = vand.u32 2147483647, %v1598
      %vm1654 = vcmp.eq.f32.partialorder %v1653, 8.507059e+37
      %v1655 = vand.u32 %v1598, 2147483648
      %v1656 = vor.u32 1.1754944e-38, %v1655
      %v1657 = vsel %vm1654, %v1656, %v1652
      %v1658 = vmul.f32 1.0, %v1657
      %v1659 = vmul.f32 %v1579, %v1613
      %v1660 = vmul.f32 %v1580, %v1628
      %v1661 = vmul.f32 %v1581, %v1643
      %v1662 = vmul.f32 %v1582, %v1658
      %s1663 = scalar_lea.vmem %s9, 128
      %v1664 = vld [vmem:[%s1663 + $0x20] sm:$0xff]
      %v1665 = vld [vmem:[%s1663 + $0x28] sm:$0xff]
      %v1666 = vld [vmem:[%s1663 + $0x30] sm:$0xff]
      %v1667 = vld [vmem:[%s1663 + $0x38] sm:$0xff]
      %s1668 = scalar_lea.vmem %s10, 128
      %v1669 = vld [vmem:[%s1668 + $0x20] sm:$0xff]
      %v1670 = vld [vmem:[%s1668 + $0x28] sm:$0xff]
      %v1671 = vld [vmem:[%s1668 + $0x30] sm:$0xff]
      %v1672 = vld [vmem:[%s1668 + $0x38] sm:$0xff]
      %1674 = vset.pattern.permute.xlu0 0
      %1675 = vperm.xlu0 %1674, %v1669
      %v1676 = vpop.permute.xlu0 %1675
      %1679 = vset.pattern.permute.xlu0 0
      %1680 = vperm.xlu0 %1679, %v1670
      %v1681 = vpop.permute.xlu0 %1680
      %1684 = vset.pattern.permute.xlu0 0
      %1685 = vperm.xlu0 %1684, %v1671
      %v1686 = vpop.permute.xlu0 %1685
      %1689 = vset.pattern.permute.xlu0 0
      %1690 = vperm.xlu0 %1689, %v1672
      %v1691 = vpop.permute.xlu0 %1690
      %v1694 = vsel %vm932, %v1664, 0
      %v1697 = vsel %vm932, %v1665, 0
      %v1700 = vsel %vm932, %v1666, 0
      %v1703 = vsel %vm932, %v1667, 0
      %1705 = vmatpush.msra.mxu0 0.0
      %1706 = vmatpush.msra.mxu0 0.0
      %1707 = vmatpush.msra.mxu0 0.0
      %1708 = vmatpush.msra.mxu0 0.0
      %1709 = vmatpush.msra.mxu0 0.0
      %1710 = vmatpush.msra.mxu0 0.0
      %1711 = vmatpush.msra.mxu0 0.0
      %1712 = vmatpush.msra.mxu0 0.0
      %1713 = vmatpush.msra.mxu0 0.0
      %1714 = vmatpush.msra.mxu0 0.0
      %1715 = vmatpush.msra.mxu0 0.0
      %1716 = vmatpush.msra.mxu0 0.0
      %1717 = vmatpush.msra.mxu0 %v1662
      %1718 = vmatpush.msra.mxu0 %v1661
      %1719 = vmatpush.msra.mxu0 %v1660
      %1720 = vmatpush.msra.mxu0 %v1659
      %1721 = vmatmul.f32.gmra.mxu0 %v1694
      %v1722 = vpop.f32.mrf.mxu0
      %v1723 = vadd.f32 %v1676, %v1722
      %1724 = vmatmul.f32.gmra.mxu0 %v1697
      %v1725 = vpop.f32.mrf.mxu0
      %v1726 = vadd.f32 %v1681, %v1725
      %1727 = vmatmul.f32.gmra.mxu0 %v1700
      %v1728 = vpop.f32.mrf.mxu0
      %v1729 = vadd.f32 %v1686, %v1728
      %1730 = vmatmul.f32.gmra.mxu0 %v1703
      %v1731 = vpop.f32.mrf.mxu0
      %v1732 = vadd.f32 %v1691, %v1731
      %1733 = vdwg.mxu0
      %v1734 = vadd.f32 %v1400, %v1723
      %v1735 = vadd.f32 %v1401, %v1726
      %v1736 = vadd.f32 %v1402, %v1729
      %v1737 = vadd.f32 %v1403, %v1732
      %v1738 = vmul.f32 %v1734, %v505
      %v1739 = vmul.f32 %v1735, %v505
      %v1740 = vmul.f32 %v1736, %v505
      %v1741 = vmul.f32 %v1737, %v505
      %v1742 = vld [vmem:[%s11] sm:$0xff]
      %v1743 = vld [vmem:[%s12] sm:$0xff]
      %1745 = vset.pattern.permute.xlu0 0
      %1746 = vperm.xlu0 %1745, %v1743
      %v1747 = vpop.permute.xlu0 %1746
      %v1750 = vsel %vm932, %v1742, 0
      %1752 = vmatpush.msra.mxu0 0.0
      %1753 = vmatpush.msra.mxu0 0.0
      %1754 = vmatpush.msra.mxu0 0.0
      %1755 = vmatpush.msra.mxu0 0.0
      %1756 = vmatpush.msra.mxu0 0.0
      %1757 = vmatpush.msra.mxu0 0.0
      %1758 = vmatpush.msra.mxu0 0.0
      %1759 = vmatpush.msra.mxu0 0.0
      %1760 = vmatpush.msra.mxu0 0.0
      %1761 = vmatpush.msra.mxu0 0.0
      %1762 = vmatpush.msra.mxu0 0.0
      %1763 = vmatpush.msra.mxu0 0.0
      %1764 = vmatpush.msra.mxu0 %v1741
      %1765 = vmatpush.msra.mxu0 %v1740
      %1766 = vmatpush.msra.mxu0 %v1739
      %1767 = vmatpush.msra.mxu0 %v1738
      %1768 = vmatmul.f32.gmra.mxu0 %v1750
      %v1769 = vpop.f32.mrf.mxu0
      %v1770 = vadd.f32 %v1747, %v1769
      %1771 = vdwg.mxu0
      %v1772 = vmul.f32 %v1770, 1.442695
      %v1773 = vpow.pop %v1772
      %v1774 = vmul.f32 %v1773, %v533
      %v1776 = vrot.slane %v1774, 4
      %v1778 = vadd.f32 %v1770, %v1776
      %v1779 = vmul.f32 %v1778, %v505
      %vm1780 = vcmask 60416
      %1781 = vst.msk [vmem:[%s482] sm:$0xf] %vm1780, %v533
      %1782 = vst.msk [vmem:[%s482 + $0x4] sm:$0xf] %vm1780, %v1779
      %v1783 = vmul.f32 %v1770, %v505
      %v1785 = vrot.slane %v1783, 4
      %v1787 = vsel %vm1780, %v1785, 0.0
      %1788 = vadd.xlane.f32.xlu0 %v1787
      %v1789 = vpop.xlane.xlu0 %1788
      %v1790 = vrot.slane %v1789, 4
      %v1791 = vadd.f32 %v1789, %v1790
      %v1792 = vrot.slane %v1791, 2
      %v1793 = vadd.f32 %v1791, %v1792
      %v1794 = vrot.slane %v1793, 1
      %v1795 = vadd.f32 %v1793, %v1794
      %s1796 = vtos %v1795
      %v1797 = vstv %s1796
      %vm1798 = vcmask 0
      %1799 = vst.msk [vmem:[%s485] sm:$0x1] %vm1798, %v1797
      %p1800 = scmp.lt.s32.totalorder %s26, 1
      %s1801 = scalar_select %p1800, %s26, 1
      %s1802 = smul.addr %s1801, 8
      %s1803 = scalar_lea.vmem %s13, %s1802
      %p1804 = scmp.lt.s32.totalorder %s26, 1
      %s1805 = scalar_select %p1804, %s26, 1
      %s1806 = scalar_lea.vmem %s14, %s1805
      // Predicated region
      $region73: #{flow_spec_decoder_forward.2} parent=71 // pred_check
        %p1807 = pneg %p327
      $region74: #{flow_spec_decoder_forward.2} parent=71 // pred_check_branch
        %1809 = sbr.rel (%p1807) target = $region76
      $region75: #{flow_spec_decoder_forward.2} parent=71 // pred_region
        _
      $region76: #{flow_spec_decoder_forward.2} parent=71 // pred_fallthru
        _
      // Predicated region
      $region77: #{flow_spec_decoder_forward.2} parent=71 // pred_check
        %p1810 = pneg %p353
      $region78: #{flow_spec_decoder_forward.2} parent=71 // pred_check_branch
        %1812 = sbr.rel (%p1810) target = $region80
      $region79: #{flow_spec_decoder_forward.2} parent=71 // pred_region
        _
      $region80: #{flow_spec_decoder_forward.2} parent=71 // pred_fallthru
        _
    $region72: #{flow_spec_decoder_forward.2} parent=5 // pred_fallthru
      _
    %p1813 = scmp.le.s32.totalorder 2, %s21
    // Predicated region
    $region81: #{flow_spec_decoder_forward.2} parent=5 // pred_check
      %p1814 = pneg %p1813
    $region82: #{flow_spec_decoder_forward.2} parent=5 // pred_check_branch
      %1816 = sbr.rel (%p1814) target = $region84
    $region83: #{flow_spec_decoder_forward.2} parent=5 // pred_region
      %s1817 = ssub.s32 %s21, 2
      // Predicated region
      $region85: #{flow_spec_decoder_forward.2} parent=83 // pred_check
        %p1818 = pneg %p333
      $region86: #{flow_spec_decoder_forward.2} parent=83 // pred_check_branch
        %1820 = sbr.rel (%p1818) target = $region88
      $region87: #{flow_spec_decoder_forward.2} parent=83 // pred_region
        %p1821 = scmp.lt.s32.totalorder %s27, 1
        %s1822 = scalar_select %p1821, %s27, 1
        %s1823 = smul.addr %s1822, 8
        %s1824 = scalar_lea.vmem %s13, %s1823
      $region88: #{flow_spec_decoder_forward.2} parent=83 // pred_fallthru
        _
      // Predicated region
      $region89: #{flow_spec_decoder_forward.2} parent=83 // pred_check
        %p1825 = pneg %p359
      $region90: #{flow_spec_decoder_forward.2} parent=83 // pred_check_branch
        %1827 = sbr.rel (%p1825) target = $region92
      $region91: #{flow_spec_decoder_forward.2} parent=83 // pred_region
        %p1828 = scmp.lt.s32.totalorder %s27, 1
        %s1829 = scalar_select %p1828, %s27, 1
        %s1830 = scalar_lea.vmem %s14, %s1829
      $region92: #{flow_spec_decoder_forward.2} parent=83 // pred_fallthru
        _
    $region84: #{flow_spec_decoder_forward.2} parent=5 // pred_fallthru
      _
  $region6: #{flow_spec_decoder_forward.2} parent=0 // loop_footer
    %s25 = sadd.s32 1, %s21
  $region7: #{flow_spec_decoder_forward.2} parent=0 // loop_footer_branch
    %20 = sbr.rel target = $region3
  $region8: #{flow_spec_decoder_forward.2} parent=0 // loop_exit
    _

</llo_original>
